<compile_context>
chip_gen: v5e
topology: v5e:2x2
jax: 0.10.0
libtpu: 0.0.40
codegen_flags: <defaults>
</compile_context>

<pallas_src>
import math

import jax
import jax.numpy as jnp
import numpy as np
from jax.experimental import pallas as pl
from jax.experimental.pallas import tpu as pltpu

# ---------------- model hyper-parameters (small, synthetic) ----------------
B = 2          # batch
S = 8          # sequence length
D = 32         # d_model (layer.size)
H = 4          # attention heads
DK = D // H    # per-head dim
F = 64         # feed-forward hidden dim
N_LAYERS = 2   # number of encoder layers
EPS = 1e-6
SCALE = 1.0 / math.sqrt(DK)


# ============================ Pallas kernel =================================

def _layer_norm(v, a, b):
    """Unbiased-std LayerNorm on the last axis (matches the torch LayerNorm module)."""
    mean = jnp.mean(v, axis=-1, keepdims=True)
    c = v - mean
    var = jnp.sum(c * c, axis=-1, keepdims=True) / (v.shape[-1] - 1)
    return a * c / (jnp.sqrt(var) + EPS) + b          # exact division (correctness)


def encoder_kernel(x_ref, mask_ref, wqkv_ref, bqkv_ref, wo_ref, bo_ref,
                   w1_ref, b1_ref, w2_ref, b2_ref, lna_ref, lnb_ref,
                   fa_ref, fb_ref, out_ref, attn_buf):
    """One batch element per grid step; all layers + final norm fused.

    Block shapes seen by the kernel:
      x:    (1, S, D)            mask: (1, 1, S)
      wqkv: (L, D, 3D)  bqkv: (L, 1, 3D)     (columns ordered [Q | K | V], head-major)
      wo:   (L, D, D)   bo:   (L, 1, D)
      w1:   (L, D, F)   b1:   (L, 1, F)      w2: (L, F, D)   b2: (L, 1, D)
      lna/lnb: (L, 2, 1, D)      fa/fb: (1, D)
      out:  (1, S, D)            attn_buf (scratch): (S, D)
    """
    x = x_ref[0]                                   # (S, D) running activations
    mvalid = mask_ref[0] != 0.0                    # (1, S) key mask, hoisted
    neg = jnp.float32(-1e9)

    for l in range(N_LAYERS):                      # static unroll (L=2); weights stay in VMEM
        # ---- sublayer 0: x + SelfAttention(LayerNorm(x)) ----
        xn = _layer_norm(x, lna_ref[l, 0], lnb_ref[l, 0])

        # ONE fused QKV projection (lane-dense 3D-wide result) instead of 3*H dots.
        qkv = (jnp.dot(xn, wqkv_ref[l], preferred_element_type=jnp.float32)
               + bqkv_ref[l])                      # (S, 3D)

        for h in range(H):                         # tiny per-head score/softmax work only
            off = h * DK
            qh = qkv[:, off:off + DK]              # static lane slices: no relayout copies
            kh = qkv[:, D + off:D + off + DK]
            vh = qkv[:, 2 * D + off:2 * D + off + DK]

            s = jnp.einsum('qd,kd->qk', qh, kh,
                           preferred_element_type=jnp.float32) * SCALE
            s = jnp.where(mvalid, s, neg)          # mask keys (broadcast over query rows)
            s = s - jnp.max(s, axis=-1, keepdims=True)
            e = jnp.exp(s)
            p = e / jnp.sum(e, axis=-1, keepdims=True)      # exact softmax
            # Merge heads by writing each head's output to its lane range of the
            # scratch buffer (sub-vreg masked store; avoids lane-axis concat).
            attn_buf[:, off:off + DK] = jnp.einsum(
                'qk,kd->qd', p, vh, preferred_element_type=jnp.float32)

        # ONE depth-D output projection over the merged heads.
        x = x + (jnp.dot(attn_buf[...], wo_ref[l],
                         preferred_element_type=jnp.float32) + bo_ref[l])

        # ---- sublayer 1: x + FFN(LayerNorm(x)) ----
        xn2 = _layer_norm(x, lna_ref[l, 1], lnb_ref[l, 1])
        hid = jnp.maximum(
            jnp.dot(xn2, w1_ref[l], preferred_element_type=jnp.float32) + b1_ref[l],
            0.0)
        x = x + jnp.dot(hid, w2_ref[l], preferred_element_type=jnp.float32) + b2_ref[l]

    # ---- final LayerNorm ----
    out_ref[0] = _layer_norm(x, fa_ref[...], fb_ref[...])


# ============================ wrapper =======================================

def pack_params(layer_params):
    """Host-side packing, done ONCE at init (outside the jitted forward).

    Concatenates Wq|Wk|Wv column-wise (head layout is preserved: head h of tensor t
    lives in columns [t*D + h*DK, t*D + (h+1)*DK)) and stacks all layers.
    """
    wqkv = jnp.stack([jnp.concatenate([p['wqkvo'][0], p['wqkvo'][1], p['wqkvo'][2]],
                                      axis=-1) for p in layer_params])      # (L, D, 3D)
    bqkv = jnp.stack([jnp.concatenate([p['bqkvo'][0], p['bqkvo'][1], p['bqkvo'][2]],
                                      axis=-1) for p in layer_params])      # (L, 1, 3D)
    wo = jnp.stack([p['wqkvo'][3] for p in layer_params])                   # (L, D, D)
    bo = jnp.stack([p['bqkvo'][3] for p in layer_params])                   # (L, 1, D)
    w1 = jnp.stack([p['w1'] for p in layer_params])                         # (L, D, F)
    b1 = jnp.stack([p['b1'] for p in layer_params])                         # (L, 1, F)
    w2 = jnp.stack([p['w2'] for p in layer_params])                         # (L, F, D)
    b2 = jnp.stack([p['b2'] for p in layer_params])                         # (L, 1, D)
    lna = jnp.stack([p['lna'] for p in layer_params])                       # (L, 2, 1, D)
    lnb = jnp.stack([p['lnb'] for p in layer_params])                       # (L, 2, 1, D)
    return wqkv, bqkv, wo, bo, w1, b1, w2, b2, lna, lnb


def _full_spec(shape):
    """Whole-array VMEM block, identical for every grid step (weights)."""
    zeros = (0,) * len(shape)
    return pl.BlockSpec(shape, lambda b, z=zeros: z)


@jax.jit
def encoder_forward(x, mask, wqkv, bqkv, wo, bo, w1, b1, w2, b2, lna, lnb,
                    final_a, final_b):
    L = wqkv.shape[0]
    grid_spec = pltpu.PrefetchScalarGridSpec(
        num_scalar_prefetch=0,
        grid=(B,),                                           # one batch element per step
        in_specs=[
            pl.BlockSpec((1, S, D), lambda b: (b, 0, 0)),    # x
            pl.BlockSpec((1, 1, S), lambda b: (b, 0, 0)),    # mask
            _full_spec((L, D, 3 * D)),                       # wqkv
            _full_spec((L, 1, 3 * D)),                       # bqkv
            _full_spec((L, D, D)),                           # wo
            _full_spec((L, 1, D)),                           # bo
            _full_spec((L, D, F)),                           # w1
            _full_spec((L, 1, F)),                           # b1
            _full_spec((L, F, D)),                           # w2
            _full_spec((L, 1, D)),                           # b2
            _full_spec((L, 2, 1, D)),                        # lna
            _full_spec((L, 2, 1, D)),                        # lnb
            _full_spec((1, D)),                              # final norm a
            _full_spec((1, D)),                              # final norm b
        ],
        out_specs=pl.BlockSpec((1, S, D), lambda b: (b, 0, 0)),
        scratch_shapes=[pltpu.VMEM((S, D), jnp.float32)],    # merged-head buffer
    )
    return pl.pallas_call(
        encoder_kernel,
        out_shape=jax.ShapeDtypeStruct((B, S, D), x.dtype),
        grid_spec=grid_spec,
        compiler_params=pltpu.CompilerParams(
            dimension_semantics=("parallel",)),              # shard batch across TCs (v7x)
    )(x, mask, wqkv, bqkv, wo, bo, w1, b1, w2, b2, lna, lnb, final_a, final_b)


# ============================ pure-JAX reference ============================

def _layer_norm_ref(x, a, b):
    mean = jnp.mean(x, axis=-1, keepdims=True)
    var = jnp.sum((x - mean) ** 2, axis=-1, keepdims=True) / (x.shape[-1] - 1)
    return a * (x - mean) / (jnp.sqrt(var) + EPS) + b


def _mha_ref(x, mask, wqkvo, bqkvo):
    Bx, Sx, Dx = x.shape
    q = x @ wqkvo[0] + bqkvo[0]
    k = x @ wqkvo[1] + bqkvo[1]
    v = x @ wqkvo[2] + bqkvo[2]
    split = lambda t: t.reshape(Bx, Sx, H, DK).transpose(0, 2, 1, 3)
    qh, kh, vh = split(q), split(k), split(v)
    scores = jnp.einsum('bhqd,bhkd->bhqk', qh, kh) / math.sqrt(DK)
    scores = jnp.where(mask[:, None, :, :] == 0, -1e9, scores)
    p = jax.nn.softmax(scores, axis=-1)
    o = jnp.einsum('bhqk,bhkd->bhqd', p, vh).transpose(0, 2, 1, 3).reshape(Bx, Sx, Dx)
    return o @ wqkvo[3] + bqkvo[3]


def encoder_ref(x, mask, layer_params, final_a, final_b):
    for p in layer_params:
        xn = _layer_norm_ref(x, p['lna'][0], p['lnb'][0])
        x = x + _mha_ref(xn, mask, p['wqkvo'], p['bqkvo'])
        xn2 = _layer_norm_ref(x, p['lna'][1], p['lnb'][1])
        hid = jnp.maximum(xn2 @ p['w1'] + p['b1'], 0.0)
        x = x + hid @ p['w2'] + p['b2']
    return _layer_norm_ref(x, final_a, final_b)


# ============================ parameter init ================================

def init_params(key):
    layer_params = []
    for _ in range(N_LAYERS):
        key, k1, k2, k3, k4, k5, k6 = jax.random.split(key, 7)
        p = {
            'wqkvo': jax.random.normal(k1, (4, D, D), jnp.float32) / math.sqrt(D),
            'bqkvo': jax.random.normal(k2, (4, 1, D), jnp.float32) * 0.01,
            'w1': jax.random.normal(k3, (D, F), jnp.float32) / math.sqrt(D),
            'b1': jax.random.normal(k4, (1, F), jnp.float32) * 0.01,
            'w2': jax.random.normal(k5, (F, D), jnp.float32) / math.sqrt(F),
            'b2': jax.random.normal(k6, (1, F if False else D), jnp.float32) * 0.01,
            'lna': jnp.ones((2, 1, D), jnp.float32),    # LayerNorm a_2 init
            'lnb': jnp.zeros((2, 1, D), jnp.float32),   # LayerNorm b_2 init
        }
        layer_params.append(p)
    final_a = jnp.ones((1, D), jnp.float32)
    final_b = jnp.zeros((1, D), jnp.float32)
    return layer_params, final_a, final_b, key


# ============================ main ==========================================

if __name__ == "__main__":
    key = jax.random.PRNGKey(0)
    layer_params, final_a, final_b, key = init_params(key)

    # Pack weights ONCE, outside the jitted forward (review item: no per-call
    # stack/concat of weights inside the jit).
    packed = pack_params(layer_params)

    key, kx = jax.random.split(key)
    x = jax.random.normal(kx, (B, S, D), jnp.float32)
    mask = jnp.ones((B, 1, S), jnp.float32)   # all positions valid

    out = jax.block_until_ready(
        encoder_forward(x, mask, *packed, final_a, final_b))

    ref = encoder_ref(x, mask, layer_params, final_a, final_b)
    np.testing.assert_allclose(np.asarray(out), np.asarray(ref),
                               rtol=1e-3, atol=1e-3)

    print("KERNEL_OK")
</pallas_src>

<mosaic_0001>
module attributes {stable_mosaic.version = 11 : i64} {
  func.func @encoder_kernel(%arg0: i32, %arg1: memref<1x8x32xf32, #tpu.memory_space<vmem>>, %arg2: memref<1x1x8xf32, #tpu.memory_space<vmem>>, %arg3: memref<2x32x96xf32, #tpu.memory_space<vmem>>, %arg4: memref<2x1x96xf32, #tpu.memory_space<vmem>>, %arg5: memref<2x32x32xf32, #tpu.memory_space<vmem>>, %arg6: memref<2x1x32xf32, #tpu.memory_space<vmem>>, %arg7: memref<2x32x64xf32, #tpu.memory_space<vmem>>, %arg8: memref<2x1x64xf32, #tpu.memory_space<vmem>>, %arg9: memref<2x64x32xf32, #tpu.memory_space<vmem>>, %arg10: memref<2x1x32xf32, #tpu.memory_space<vmem>>, %arg11: memref<2x2x1x32xf32, #tpu.memory_space<vmem>>, %arg12: memref<2x2x1x32xf32, #tpu.memory_space<vmem>>, %arg13: memref<1x32xf32, #tpu.memory_space<vmem>>, %arg14: memref<1x32xf32, #tpu.memory_space<vmem>>, %arg15: memref<1x8x32xf32, #tpu.memory_space<vmem>>, %arg16: memref<8x32xf32, #tpu.memory_space<vmem>>) attributes {dimension_semantics = [#tpu.dimension_semantics<parallel>], iteration_bounds = array<i64: 2>, scalar_prefetch = 0 : i64, scratch_operands = 1 : i64, tpu.core_type = #tpu.core_type<tc>, window_params = [{transform_indices = @transform_0, window_bounds = array<i64: 1, 8, 32>}, {transform_indices = @transform_1, window_bounds = array<i64: 1, 1, 8>}, {pipeline_mode = #tpu.pipeline_mode<synchronous>, transform_indices = @transform_2, window_bounds = array<i64: 2, 32, 96>}, {pipeline_mode = #tpu.pipeline_mode<synchronous>, transform_indices = @transform_3, window_bounds = array<i64: 2, 1, 96>}, {pipeline_mode = #tpu.pipeline_mode<synchronous>, transform_indices = @transform_4, window_bounds = array<i64: 2, 32, 32>}, {pipeline_mode = #tpu.pipeline_mode<synchronous>, transform_indices = @transform_5, window_bounds = array<i64: 2, 1, 32>}, {pipeline_mode = #tpu.pipeline_mode<synchronous>, transform_indices = @transform_6, window_bounds = array<i64: 2, 32, 64>}, {pipeline_mode = #tpu.pipeline_mode<synchronous>, transform_indices = @transform_7, window_bounds = array<i64: 2, 1, 64>}, {pipeline_mode = #tpu.pipeline_mode<synchronous>, transform_indices = @transform_8, window_bounds = array<i64: 2, 64, 32>}, {pipeline_mode = #tpu.pipeline_mode<synchronous>, transform_indices = @transform_9, window_bounds = array<i64: 2, 1, 32>}, {pipeline_mode = #tpu.pipeline_mode<synchronous>, transform_indices = @transform_10, window_bounds = array<i64: 2, 2, 1, 32>}, {pipeline_mode = #tpu.pipeline_mode<synchronous>, transform_indices = @transform_11, window_bounds = array<i64: 2, 2, 1, 32>}, {pipeline_mode = #tpu.pipeline_mode<synchronous>, transform_indices = @transform_12, window_bounds = array<i64: 1, 32>}, {pipeline_mode = #tpu.pipeline_mode<synchronous>, transform_indices = @transform_13, window_bounds = array<i64: 1, 32>}, {transform_indices = @transform_14, window_bounds = array<i64: 1, 8, 32>}]} {
    %c0 = arith.constant 0 : index
    %c0_0 = arith.constant 0 : index
    %c0_1 = arith.constant 0 : index
    %0 = vector.load %arg1[%c0, %c0_0, %c0_1] : memref<1x8x32xf32, #tpu.memory_space<vmem>>, vector<1x8x32xf32>
    %1 = vector.shape_cast %0 : vector<1x8x32xf32> to vector<8x32xf32>
    %c0_2 = arith.constant 0 : index
    %c0_3 = arith.constant 0 : index
    %c0_4 = arith.constant 0 : index
    %2 = vector.load %arg2[%c0_2, %c0_3, %c0_4] : memref<1x1x8xf32, #tpu.memory_space<vmem>>, vector<1x1x8xf32>
    %3 = vector.shape_cast %2 : vector<1x1x8xf32> to vector<1x8xf32>
    %cst = arith.constant 0.000000e+00 : f32
    %4 = vector.broadcast %cst : f32 to vector<1x8xf32>
    %5 = arith.cmpf one, %3, %4 : vector<1x8xf32>
    %c0_5 = arith.constant 0 : index
    %c0_6 = arith.constant 0 : index
    %c0_7 = arith.constant 0 : index
    %c0_8 = arith.constant 0 : index
    %6 = vector.load %arg11[%c0_5, %c0_6, %c0_7, %c0_8] : memref<2x2x1x32xf32, #tpu.memory_space<vmem>>, vector<1x1x1x32xf32>
    %7 = vector.shape_cast %6 : vector<1x1x1x32xf32> to vector<1x32xf32>
    %c0_9 = arith.constant 0 : index
    %c0_10 = arith.constant 0 : index
    %c0_11 = arith.constant 0 : index
    %c0_12 = arith.constant 0 : index
    %8 = vector.load %arg12[%c0_9, %c0_10, %c0_11, %c0_12] : memref<2x2x1x32xf32, #tpu.memory_space<vmem>>, vector<1x1x1x32xf32>
    %9 = vector.shape_cast %8 : vector<1x1x1x32xf32> to vector<1x32xf32>
    %cst_13 = arith.constant dense<0.000000e+00> : vector<8xf32>
    %10 = vector.multi_reduction <add>, %1, %cst_13 [1] : vector<8x32xf32> to vector<8xf32>
    %11 = vector.shape_cast %10 : vector<8xf32> to vector<8x1xf32>
    %cst_14 = arith.constant 3.200000e+01 : f32
    %12 = vector.broadcast %cst_14 : f32 to vector<8x1xf32>
    %13 = arith.divf %11, %12 : vector<8x1xf32>
    %14 = vector.broadcast %13 : vector<8x1xf32> to vector<8x32xf32>
    %15 = arith.subf %1, %14 : vector<8x32xf32>
    %16 = arith.mulf %15, %15 : vector<8x32xf32>
    %cst_15 = arith.constant dense<0.000000e+00> : vector<8xf32>
    %17 = vector.multi_reduction <add>, %16, %cst_15 [1] : vector<8x32xf32> to vector<8xf32>
    %18 = vector.shape_cast %17 : vector<8xf32> to vector<8x1xf32>
    %cst_16 = arith.constant 3.100000e+01 : f32
    %19 = vector.broadcast %cst_16 : f32 to vector<8x1xf32>
    %20 = arith.divf %18, %19 : vector<8x1xf32>
    %21 = vector.broadcast %7 : vector<1x32xf32> to vector<8x32xf32>
    %22 = arith.mulf %21, %15 : vector<8x32xf32>
    %23 = math.sqrt %20 : vector<8x1xf32>
    %cst_17 = arith.constant 9.99999997E-7 : f32
    %24 = vector.broadcast %cst_17 : f32 to vector<8x1xf32>
    %25 = arith.addf %23, %24 : vector<8x1xf32>
    %26 = vector.broadcast %25 : vector<8x1xf32> to vector<8x32xf32>
    %27 = arith.divf %22, %26 : vector<8x32xf32>
    %28 = vector.broadcast %9 : vector<1x32xf32> to vector<8x32xf32>
    %29 = arith.addf %27, %28 : vector<8x32xf32>
    %c0_18 = arith.constant 0 : index
    %c0_19 = arith.constant 0 : index
    %c0_20 = arith.constant 0 : index
    %30 = vector.load %arg3[%c0_18, %c0_19, %c0_20] : memref<2x32x96xf32, #tpu.memory_space<vmem>>, vector<1x32x96xf32>
    %31 = vector.shape_cast %30 : vector<1x32x96xf32> to vector<32x96xf32>
    %cst_21 = arith.constant dense<0.000000e+00> : vector<8x96xf32>
    %32 = tpu.matmul %29, %31, %cst_21 {dimension_numbers = #tpu.dot_dimension_numbers<[1], [0], [0], [1], [0, 0, 1, 1], [], []>} : vector<8x32xf32>, vector<32x96xf32>, vector<8x96xf32> -> vector<8x96xf32>
    %c0_22 = arith.constant 0 : index
    %c0_23 = arith.constant 0 : index
    %c0_24 = arith.constant 0 : index
    %33 = vector.load %arg4[%c0_22, %c0_23, %c0_24] : memref<2x1x96xf32, #tpu.memory_space<vmem>>, vector<1x1x96xf32>
    %34 = vector.shape_cast %33 : vector<1x1x96xf32> to vector<1x96xf32>
    %35 = vector.broadcast %34 : vector<1x96xf32> to vector<8x96xf32>
    %36 = arith.addf %32, %35 : vector<8x96xf32>
    %37 = vector.extract_strided_slice %36 {offsets = [0, 0], sizes = [8, 8], strides = [1, 1]} : vector<8x96xf32> to vector<8x8xf32>
    %38 = vector.extract_strided_slice %36 {offsets = [0, 32], sizes = [8, 8], strides = [1, 1]} : vector<8x96xf32> to vector<8x8xf32>
    %39 = vector.extract_strided_slice %36 {offsets = [0, 64], sizes = [8, 8], strides = [1, 1]} : vector<8x96xf32> to vector<8x8xf32>
    "tpu.trace_start"() <{level = 10 : i32, message = "qd,kd->qk"}> : () -> ()
    %cst_25 = arith.constant dense<0.000000e+00> : vector<8x8xf32>
    %40 = tpu.matmul %37, %38, %cst_25 {dimension_numbers = #tpu.dot_dimension_numbers<[1], [1], [0], [0], [0, 0, 1, 0], [], []>} : vector<8x8xf32>, vector<8x8xf32>, vector<8x8xf32> -> vector<8x8xf32>
    "tpu.trace_stop"() : () -> ()
    %cst_26 = arith.constant 0.353553385 : f32
    %41 = vector.broadcast %cst_26 : f32 to vector<8x8xf32>
    %42 = arith.mulf %40, %41 : vector<8x8xf32>
    %cst_27 = arith.constant -1.000000e+09 : f32
    %43 = vector.shape_cast %5 : vector<1x8xi1> to vector<1x8xi1>
    %44 = vector.broadcast %43 : vector<1x8xi1> to vector<8x8xi1>
    %45 = vector.broadcast %cst_27 : f32 to vector<8x8xf32>
    %46 = arith.select %44, %42, %45 : vector<8x8xi1>, vector<8x8xf32>
    %cst_28 = arith.constant dense<0xFF800000> : vector<8xf32>
    %47 = vector.multi_reduction <maximumf>, %46, %cst_28 [1] : vector<8x8xf32> to vector<8xf32>
    %48 = vector.shape_cast %47 : vector<8xf32> to vector<8x1xf32>
    %49 = vector.broadcast %48 : vector<8x1xf32> to vector<8x8xf32>
    %50 = arith.subf %46, %49 : vector<8x8xf32>
    %51 = math.exp %50 : vector<8x8xf32>
    %cst_29 = arith.constant dense<0.000000e+00> : vector<8xf32>
    %52 = vector.multi_reduction <add>, %51, %cst_29 [1] : vector<8x8xf32> to vector<8xf32>
    %53 = vector.shape_cast %52 : vector<8xf32> to vector<8x1xf32>
    %54 = vector.broadcast %53 : vector<8x1xf32> to vector<8x8xf32>
    %55 = arith.divf %51, %54 : vector<8x8xf32>
    "tpu.trace_start"() <{level = 10 : i32, message = "qk,kd->qd"}> : () -> ()
    %cst_30 = arith.constant dense<0.000000e+00> : vector<8x8xf32>
    %56 = tpu.matmul %55, %39, %cst_30 {dimension_numbers = #tpu.dot_dimension_numbers<[1], [0], [0], [1], [0, 0, 1, 1], [], []>} : vector<8x8xf32>, vector<8x8xf32>, vector<8x8xf32> -> vector<8x8xf32>
    "tpu.trace_stop"() : () -> ()
    %c0_31 = arith.constant 0 : index
    %c0_32 = arith.constant 0 : index
    %57 = vector.load %arg16[%c0_31, %c0_32] : memref<8x32xf32, #tpu.memory_space<vmem>>, vector<8x8xf32>
    tpu.vector_store %arg16[%c0_31, %c0_32], %56 {strides = array<i32>} : memref<8x32xf32, #tpu.memory_space<vmem>>, vector<8x8xf32>,
    %58 = vector.extract_strided_slice %36 {offsets = [0, 8], sizes = [8, 8], strides = [1, 1]} : vector<8x96xf32> to vector<8x8xf32>
    %59 = vector.extract_strided_slice %36 {offsets = [0, 40], sizes = [8, 8], strides = [1, 1]} : vector<8x96xf32> to vector<8x8xf32>
    %60 = vector.extract_strided_slice %36 {offsets = [0, 72], sizes = [8, 8], strides = [1, 1]} : vector<8x96xf32> to vector<8x8xf32>
    "tpu.trace_start"() <{level = 10 : i32, message = "qd,kd->qk"}> : () -> ()
    %cst_33 = arith.constant dense<0.000000e+00> : vector<8x8xf32>
    %61 = tpu.matmul %58, %59, %cst_33 {dimension_numbers = #tpu.dot_dimension_numbers<[1], [1], [0], [0], [0, 0, 1, 0], [], []>} : vector<8x8xf32>, vector<8x8xf32>, vector<8x8xf32> -> vector<8x8xf32>
    "tpu.trace_stop"() : () -> ()
    %cst_34 = arith.constant 0.353553385 : f32
    %62 = vector.broadcast %cst_34 : f32 to vector<8x8xf32>
    %63 = arith.mulf %61, %62 : vector<8x8xf32>
    %cst_35 = arith.constant -1.000000e+09 : f32
    %64 = vector.shape_cast %5 : vector<1x8xi1> to vector<1x8xi1>
    %65 = vector.broadcast %64 : vector<1x8xi1> to vector<8x8xi1>
    %66 = vector.broadcast %cst_35 : f32 to vector<8x8xf32>
    %67 = arith.select %65, %63, %66 : vector<8x8xi1>, vector<8x8xf32>
    %cst_36 = arith.constant dense<0xFF800000> : vector<8xf32>
    %68 = vector.multi_reduction <maximumf>, %67, %cst_36 [1] : vector<8x8xf32> to vector<8xf32>
    %69 = vector.shape_cast %68 : vector<8xf32> to vector<8x1xf32>
    %70 = vector.broadcast %69 : vector<8x1xf32> to vector<8x8xf32>
    %71 = arith.subf %67, %70 : vector<8x8xf32>
    %72 = math.exp %71 : vector<8x8xf32>
    %cst_37 = arith.constant dense<0.000000e+00> : vector<8xf32>
    %73 = vector.multi_reduction <add>, %72, %cst_37 [1] : vector<8x8xf32> to vector<8xf32>
    %74 = vector.shape_cast %73 : vector<8xf32> to vector<8x1xf32>
    %75 = vector.broadcast %74 : vector<8x1xf32> to vector<8x8xf32>
    %76 = arith.divf %72, %75 : vector<8x8xf32>
    "tpu.trace_start"() <{level = 10 : i32, message = "qk,kd->qd"}> : () -> ()
    %cst_38 = arith.constant dense<0.000000e+00> : vector<8x8xf32>
    %77 = tpu.matmul %76, %60, %cst_38 {dimension_numbers = #tpu.dot_dimension_numbers<[1], [0], [0], [1], [0, 0, 1, 1], [], []>} : vector<8x8xf32>, vector<8x8xf32>, vector<8x8xf32> -> vector<8x8xf32>
    "tpu.trace_stop"() : () -> ()
    %c0_39 = arith.constant 0 : index
    %c8 = arith.constant 8 : index
    %78 = vector.load %arg16[%c0_39, %c8] : memref<8x32xf32, #tpu.memory_space<vmem>>, vector<8x8xf32>
    tpu.vector_store %arg16[%c0_39, %c8], %77 {strides = array<i32>} : memref<8x32xf32, #tpu.memory_space<vmem>>, vector<8x8xf32>,
    %79 = vector.extract_strided_slice %36 {offsets = [0, 16], sizes = [8, 8], strides = [1, 1]} : vector<8x96xf32> to vector<8x8xf32>
    %80 = vector.extract_strided_slice %36 {offsets = [0, 48], sizes = [8, 8], strides = [1, 1]} : vector<8x96xf32> to vector<8x8xf32>
    %81 = vector.extract_strided_slice %36 {offsets = [0, 80], sizes = [8, 8], strides = [1, 1]} : vector<8x96xf32> to vector<8x8xf32>
    "tpu.trace_start"() <{level = 10 : i32, message = "qd,kd->qk"}> : () -> ()
    %cst_40 = arith.constant dense<0.000000e+00> : vector<8x8xf32>
    %82 = tpu.matmul %79, %80, %cst_40 {dimension_numbers = #tpu.dot_dimension_numbers<[1], [1], [0], [0], [0, 0, 1, 0], [], []>} : vector<8x8xf32>, vector<8x8xf32>, vector<8x8xf32> -> vector<8x8xf32>
    "tpu.trace_stop"() : () -> ()
    %cst_41 = arith.constant 0.353553385 : f32
    %83 = vector.broadcast %cst_41 : f32 to vector<8x8xf32>
    %84 = arith.mulf %82, %83 : vector<8x8xf32>
    %cst_42 = arith.constant -1.000000e+09 : f32
    %85 = vector.shape_cast %5 : vector<1x8xi1> to vector<1x8xi1>
    %86 = vector.broadcast %85 : vector<1x8xi1> to vector<8x8xi1>
    %87 = vector.broadcast %cst_42 : f32 to vector<8x8xf32>
    %88 = arith.select %86, %84, %87 : vector<8x8xi1>, vector<8x8xf32>
    %cst_43 = arith.constant dense<0xFF800000> : vector<8xf32>
    %89 = vector.multi_reduction <maximumf>, %88, %cst_43 [1] : vector<8x8xf32> to vector<8xf32>
    %90 = vector.shape_cast %89 : vector<8xf32> to vector<8x1xf32>
    %91 = vector.broadcast %90 : vector<8x1xf32> to vector<8x8xf32>
    %92 = arith.subf %88, %91 : vector<8x8xf32>
    %93 = math.exp %92 : vector<8x8xf32>
    %cst_44 = arith.constant dense<0.000000e+00> : vector<8xf32>
    %94 = vector.multi_reduction <add>, %93, %cst_44 [1] : vector<8x8xf32> to vector<8xf32>
    %95 = vector.shape_cast %94 : vector<8xf32> to vector<8x1xf32>
    %96 = vector.broadcast %95 : vector<8x1xf32> to vector<8x8xf32>
    %97 = arith.divf %93, %96 : vector<8x8xf32>
    "tpu.trace_start"() <{level = 10 : i32, message = "qk,kd->qd"}> : () -> ()
    %cst_45 = arith.constant dense<0.000000e+00> : vector<8x8xf32>
    %98 = tpu.matmul %97, %81, %cst_45 {dimension_numbers = #tpu.dot_dimension_numbers<[1], [0], [0], [1], [0, 0, 1, 1], [], []>} : vector<8x8xf32>, vector<8x8xf32>, vector<8x8xf32> -> vector<8x8xf32>
    "tpu.trace_stop"() : () -> ()
    %c0_46 = arith.constant 0 : index
    %c16 = arith.constant 16 : index
    %99 = vector.load %arg16[%c0_46, %c16] : memref<8x32xf32, #tpu.memory_space<vmem>>, vector<8x8xf32>
    tpu.vector_store %arg16[%c0_46, %c16], %98 {strides = array<i32>} : memref<8x32xf32, #tpu.memory_space<vmem>>, vector<8x8xf32>,
    %100 = vector.extract_strided_slice %36 {offsets = [0, 24], sizes = [8, 8], strides = [1, 1]} : vector<8x96xf32> to vector<8x8xf32>
    %101 = vector.extract_strided_slice %36 {offsets = [0, 56], sizes = [8, 8], strides = [1, 1]} : vector<8x96xf32> to vector<8x8xf32>
    %102 = vector.extract_strided_slice %36 {offsets = [0, 88], sizes = [8, 8], strides = [1, 1]} : vector<8x96xf32> to vector<8x8xf32>
    "tpu.trace_start"() <{level = 10 : i32, message = "qd,kd->qk"}> : () -> ()
    %cst_47 = arith.constant dense<0.000000e+00> : vector<8x8xf32>
    %103 = tpu.matmul %100, %101, %cst_47 {dimension_numbers = #tpu.dot_dimension_numbers<[1], [1], [0], [0], [0, 0, 1, 0], [], []>} : vector<8x8xf32>, vector<8x8xf32>, vector<8x8xf32> -> vector<8x8xf32>
    "tpu.trace_stop"() : () -> ()
    %cst_48 = arith.constant 0.353553385 : f32
    %104 = vector.broadcast %cst_48 : f32 to vector<8x8xf32>
    %105 = arith.mulf %103, %104 : vector<8x8xf32>
    %cst_49 = arith.constant -1.000000e+09 : f32
    %106 = vector.shape_cast %5 : vector<1x8xi1> to vector<1x8xi1>
    %107 = vector.broadcast %106 : vector<1x8xi1> to vector<8x8xi1>
    %108 = vector.broadcast %cst_49 : f32 to vector<8x8xf32>
    %109 = arith.select %107, %105, %108 : vector<8x8xi1>, vector<8x8xf32>
    %cst_50 = arith.constant dense<0xFF800000> : vector<8xf32>
    %110 = vector.multi_reduction <maximumf>, %109, %cst_50 [1] : vector<8x8xf32> to vector<8xf32>
    %111 = vector.shape_cast %110 : vector<8xf32> to vector<8x1xf32>
    %112 = vector.broadcast %111 : vector<8x1xf32> to vector<8x8xf32>
    %113 = arith.subf %109, %112 : vector<8x8xf32>
    %114 = math.exp %113 : vector<8x8xf32>
    %cst_51 = arith.constant dense<0.000000e+00> : vector<8xf32>
    %115 = vector.multi_reduction <add>, %114, %cst_51 [1] : vector<8x8xf32> to vector<8xf32>
    %116 = vector.shape_cast %115 : vector<8xf32> to vector<8x1xf32>
    %117 = vector.broadcast %116 : vector<8x1xf32> to vector<8x8xf32>
    %118 = arith.divf %114, %117 : vector<8x8xf32>
    "tpu.trace_start"() <{level = 10 : i32, message = "qk,kd->qd"}> : () -> ()
    %cst_52 = arith.constant dense<0.000000e+00> : vector<8x8xf32>
    %119 = tpu.matmul %118, %102, %cst_52 {dimension_numbers = #tpu.dot_dimension_numbers<[1], [0], [0], [1], [0, 0, 1, 1], [], []>} : vector<8x8xf32>, vector<8x8xf32>, vector<8x8xf32> -> vector<8x8xf32>
    "tpu.trace_stop"() : () -> ()
    %c0_53 = arith.constant 0 : index
    %c24 = arith.constant 24 : index
    %120 = vector.load %arg16[%c0_53, %c24] : memref<8x32xf32, #tpu.memory_space<vmem>>, vector<8x8xf32>
    tpu.vector_store %arg16[%c0_53, %c24], %119 {strides = array<i32>} : memref<8x32xf32, #tpu.memory_space<vmem>>, vector<8x8xf32>,
    %c0_54 = arith.constant 0 : index
    %c0_55 = arith.constant 0 : index
    %121 = vector.load %arg16[%c0_54, %c0_55] : memref<8x32xf32, #tpu.memory_space<vmem>>, vector<8x32xf32>
    %c0_56 = arith.constant 0 : index
    %c0_57 = arith.constant 0 : index
    %c0_58 = arith.constant 0 : index
    %122 = vector.load %arg5[%c0_56, %c0_57, %c0_58] : memref<2x32x32xf32, #tpu.memory_space<vmem>>, vector<1x32x32xf32>
    %123 = vector.shape_cast %122 : vector<1x32x32xf32> to vector<32x32xf32>
    %cst_59 = arith.constant dense<0.000000e+00> : vector<8x32xf32>
    %124 = tpu.matmul %121, %123, %cst_59 {dimension_numbers = #tpu.dot_dimension_numbers<[1], [0], [0], [1], [0, 0, 1, 1], [], []>} : vector<8x32xf32>, vector<32x32xf32>, vector<8x32xf32> -> vector<8x32xf32>
    %c0_60 = arith.constant 0 : index
    %c0_61 = arith.constant 0 : index
    %c0_62 = arith.constant 0 : index
    %125 = vector.load %arg6[%c0_60, %c0_61, %c0_62] : memref<2x1x32xf32, #tpu.memory_space<vmem>>, vector<1x1x32xf32>
    %126 = vector.shape_cast %125 : vector<1x1x32xf32> to vector<1x32xf32>
    %127 = vector.broadcast %126 : vector<1x32xf32> to vector<8x32xf32>
    %128 = arith.addf %124, %127 : vector<8x32xf32>
    %129 = arith.addf %1, %128 : vector<8x32xf32>
    %c0_63 = arith.constant 0 : index
    %c1 = arith.constant 1 : index
    %c0_64 = arith.constant 0 : index
    %c0_65 = arith.constant 0 : index
    %130 = vector.load %arg11[%c0_63, %c1, %c0_64, %c0_65] : memref<2x2x1x32xf32, #tpu.memory_space<vmem>>, vector<1x1x1x32xf32>
    %131 = vector.shape_cast %130 : vector<1x1x1x32xf32> to vector<1x32xf32>
    %c0_66 = arith.constant 0 : index
    %c1_67 = arith.constant 1 : index
    %c0_68 = arith.constant 0 : index
    %c0_69 = arith.constant 0 : index
    %132 = vector.load %arg12[%c0_66, %c1_67, %c0_68, %c0_69] : memref<2x2x1x32xf32, #tpu.memory_space<vmem>>, vector<1x1x1x32xf32>
    %133 = vector.shape_cast %132 : vector<1x1x1x32xf32> to vector<1x32xf32>
    %cst_70 = arith.constant dense<0.000000e+00> : vector<8xf32>
    %134 = vector.multi_reduction <add>, %129, %cst_70 [1] : vector<8x32xf32> to vector<8xf32>
    %135 = vector.shape_cast %134 : vector<8xf32> to vector<8x1xf32>
    %cst_71 = arith.constant 3.200000e+01 : f32
    %136 = vector.broadcast %cst_71 : f32 to vector<8x1xf32>
    %137 = arith.divf %135, %136 : vector<8x1xf32>
    %138 = vector.broadcast %137 : vector<8x1xf32> to vector<8x32xf32>
    %139 = arith.subf %129, %138 : vector<8x32xf32>
    %140 = arith.mulf %139, %139 : vector<8x32xf32>
    %cst_72 = arith.constant dense<0.000000e+00> : vector<8xf32>
    %141 = vector.multi_reduction <add>, %140, %cst_72 [1] : vector<8x32xf32> to vector<8xf32>
    %142 = vector.shape_cast %141 : vector<8xf32> to vector<8x1xf32>
    %cst_73 = arith.constant 3.100000e+01 : f32
    %143 = vector.broadcast %cst_73 : f32 to vector<8x1xf32>
    %144 = arith.divf %142, %143 : vector<8x1xf32>
    %145 = vector.broadcast %131 : vector<1x32xf32> to vector<8x32xf32>
    %146 = arith.mulf %145, %139 : vector<8x32xf32>
    %147 = math.sqrt %144 : vector<8x1xf32>
    %cst_74 = arith.constant 9.99999997E-7 : f32
    %148 = vector.broadcast %cst_74 : f32 to vector<8x1xf32>
    %149 = arith.addf %147, %148 : vector<8x1xf32>
    %150 = vector.broadcast %149 : vector<8x1xf32> to vector<8x32xf32>
    %151 = arith.divf %146, %150 : vector<8x32xf32>
    %152 = vector.broadcast %133 : vector<1x32xf32> to vector<8x32xf32>
    %153 = arith.addf %151, %152 : vector<8x32xf32>
    %c0_75 = arith.constant 0 : index
    %c0_76 = arith.constant 0 : index
    %c0_77 = arith.constant 0 : index
    %154 = vector.load %arg7[%c0_75, %c0_76, %c0_77] : memref<2x32x64xf32, #tpu.memory_space<vmem>>, vector<1x32x64xf32>
    %155 = vector.shape_cast %154 : vector<1x32x64xf32> to vector<32x64xf32>
    %cst_78 = arith.constant dense<0.000000e+00> : vector<8x64xf32>
    %156 = tpu.matmul %153, %155, %cst_78 {dimension_numbers = #tpu.dot_dimension_numbers<[1], [0], [0], [1], [0, 0, 1, 1], [], []>} : vector<8x32xf32>, vector<32x64xf32>, vector<8x64xf32> -> vector<8x64xf32>
    %c0_79 = arith.constant 0 : index
    %c0_80 = arith.constant 0 : index
    %c0_81 = arith.constant 0 : index
    %157 = vector.load %arg8[%c0_79, %c0_80, %c0_81] : memref<2x1x64xf32, #tpu.memory_space<vmem>>, vector<1x1x64xf32>
    %158 = vector.shape_cast %157 : vector<1x1x64xf32> to vector<1x64xf32>
    %159 = vector.broadcast %158 : vector<1x64xf32> to vector<8x64xf32>
    %160 = arith.addf %156, %159 : vector<8x64xf32>
    %cst_82 = arith.constant 0.000000e+00 : f32
    %161 = vector.broadcast %cst_82 : f32 to vector<8x64xf32>
    %162 = arith.maximumf %160, %161 : vector<8x64xf32>
    %c0_83 = arith.constant 0 : index
    %c0_84 = arith.constant 0 : index
    %c0_85 = arith.constant 0 : index
    %163 = vector.load %arg9[%c0_83, %c0_84, %c0_85] : memref<2x64x32xf32, #tpu.memory_space<vmem>>, vector<1x64x32xf32>
    %164 = vector.shape_cast %163 : vector<1x64x32xf32> to vector<64x32xf32>
    %cst_86 = arith.constant dense<0.000000e+00> : vector<8x32xf32>
    %165 = tpu.matmul %162, %164, %cst_86 {dimension_numbers = #tpu.dot_dimension_numbers<[1], [0], [0], [1], [0, 0, 1, 1], [], []>} : vector<8x64xf32>, vector<64x32xf32>, vector<8x32xf32> -> vector<8x32xf32>
    %166 = arith.addf %129, %165 : vector<8x32xf32>
    %c0_87 = arith.constant 0 : index
    %c0_88 = arith.constant 0 : index
    %c0_89 = arith.constant 0 : index
    %167 = vector.load %arg10[%c0_87, %c0_88, %c0_89] : memref<2x1x32xf32, #tpu.memory_space<vmem>>, vector<1x1x32xf32>
    %168 = vector.shape_cast %167 : vector<1x1x32xf32> to vector<1x32xf32>
    %169 = vector.broadcast %168 : vector<1x32xf32> to vector<8x32xf32>
    %170 = arith.addf %166, %169 : vector<8x32xf32>
    %c1_90 = arith.constant 1 : index
    %c0_91 = arith.constant 0 : index
    %c0_92 = arith.constant 0 : index
    %c0_93 = arith.constant 0 : index
    %171 = vector.load %arg11[%c1_90, %c0_91, %c0_92, %c0_93] : memref<2x2x1x32xf32, #tpu.memory_space<vmem>>, vector<1x1x1x32xf32>
    %172 = vector.shape_cast %171 : vector<1x1x1x32xf32> to vector<1x32xf32>
    %c1_94 = arith.constant 1 : index
    %c0_95 = arith.constant 0 : index
    %c0_96 = arith.constant 0 : index
    %c0_97 = arith.constant 0 : index
    %173 = vector.load %arg12[%c1_94, %c0_95, %c0_96, %c0_97] : memref<2x2x1x32xf32, #tpu.memory_space<vmem>>, vector<1x1x1x32xf32>
    %174 = vector.shape_cast %173 : vector<1x1x1x32xf32> to vector<1x32xf32>
    %cst_98 = arith.constant dense<0.000000e+00> : vector<8xf32>
    %175 = vector.multi_reduction <add>, %170, %cst_98 [1] : vector<8x32xf32> to vector<8xf32>
    %176 = vector.shape_cast %175 : vector<8xf32> to vector<8x1xf32>
    %cst_99 = arith.constant 3.200000e+01 : f32
    %177 = vector.broadcast %cst_99 : f32 to vector<8x1xf32>
    %178 = arith.divf %176, %177 : vector<8x1xf32>
    %179 = vector.broadcast %178 : vector<8x1xf32> to vector<8x32xf32>
    %180 = arith.subf %170, %179 : vector<8x32xf32>
    %181 = arith.mulf %180, %180 : vector<8x32xf32>
    %cst_100 = arith.constant dense<0.000000e+00> : vector<8xf32>
    %182 = vector.multi_reduction <add>, %181, %cst_100 [1] : vector<8x32xf32> to vector<8xf32>
    %183 = vector.shape_cast %182 : vector<8xf32> to vector<8x1xf32>
    %cst_101 = arith.constant 3.100000e+01 : f32
    %184 = vector.broadcast %cst_101 : f32 to vector<8x1xf32>
    %185 = arith.divf %183, %184 : vector<8x1xf32>
    %186 = vector.broadcast %172 : vector<1x32xf32> to vector<8x32xf32>
    %187 = arith.mulf %186, %180 : vector<8x32xf32>
    %188 = math.sqrt %185 : vector<8x1xf32>
    %cst_102 = arith.constant 9.99999997E-7 : f32
    %189 = vector.broadcast %cst_102 : f32 to vector<8x1xf32>
    %190 = arith.addf %188, %189 : vector<8x1xf32>
    %191 = vector.broadcast %190 : vector<8x1xf32> to vector<8x32xf32>
    %192 = arith.divf %187, %191 : vector<8x32xf32>
    %193 = vector.broadcast %174 : vector<1x32xf32> to vector<8x32xf32>
    %194 = arith.addf %192, %193 : vector<8x32xf32>
    %c1_103 = arith.constant 1 : index
    %c0_104 = arith.constant 0 : index
    %c0_105 = arith.constant 0 : index
    %195 = vector.load %arg3[%c1_103, %c0_104, %c0_105] : memref<2x32x96xf32, #tpu.memory_space<vmem>>, vector<1x32x96xf32>
    %196 = vector.shape_cast %195 : vector<1x32x96xf32> to vector<32x96xf32>
    %cst_106 = arith.constant dense<0.000000e+00> : vector<8x96xf32>
    %197 = tpu.matmul %194, %196, %cst_106 {dimension_numbers = #tpu.dot_dimension_numbers<[1], [0], [0], [1], [0, 0, 1, 1], [], []>} : vector<8x32xf32>, vector<32x96xf32>, vector<8x96xf32> -> vector<8x96xf32>
    %c1_107 = arith.constant 1 : index
    %c0_108 = arith.constant 0 : index
    %c0_109 = arith.constant 0 : index
    %198 = vector.load %arg4[%c1_107, %c0_108, %c0_109] : memref<2x1x96xf32, #tpu.memory_space<vmem>>, vector<1x1x96xf32>
    %199 = vector.shape_cast %198 : vector<1x1x96xf32> to vector<1x96xf32>
    %200 = vector.broadcast %199 : vector<1x96xf32> to vector<8x96xf32>
    %201 = arith.addf %197, %200 : vector<8x96xf32>
    %202 = vector.extract_strided_slice %201 {offsets = [0, 0], sizes = [8, 8], strides = [1, 1]} : vector<8x96xf32> to vector<8x8xf32>
    %203 = vector.extract_strided_slice %201 {offsets = [0, 32], sizes = [8, 8], strides = [1, 1]} : vector<8x96xf32> to vector<8x8xf32>
    %204 = vector.extract_strided_slice %201 {offsets = [0, 64], sizes = [8, 8], strides = [1, 1]} : vector<8x96xf32> to vector<8x8xf32>
    "tpu.trace_start"() <{level = 10 : i32, message = "qd,kd->qk"}> : () -> ()
    %cst_110 = arith.constant dense<0.000000e+00> : vector<8x8xf32>
    %205 = tpu.matmul %202, %203, %cst_110 {dimension_numbers = #tpu.dot_dimension_numbers<[1], [1], [0], [0], [0, 0, 1, 0], [], []>} : vector<8x8xf32>, vector<8x8xf32>, vector<8x8xf32> -> vector<8x8xf32>
    "tpu.trace_stop"() : () -> ()
    %cst_111 = arith.constant 0.353553385 : f32
    %206 = vector.broadcast %cst_111 : f32 to vector<8x8xf32>
    %207 = arith.mulf %205, %206 : vector<8x8xf32>
    %cst_112 = arith.constant -1.000000e+09 : f32
    %208 = vector.shape_cast %5 : vector<1x8xi1> to vector<1x8xi1>
    %209 = vector.broadcast %208 : vector<1x8xi1> to vector<8x8xi1>
    %210 = vector.broadcast %cst_112 : f32 to vector<8x8xf32>
    %211 = arith.select %209, %207, %210 : vector<8x8xi1>, vector<8x8xf32>
    %cst_113 = arith.constant dense<0xFF800000> : vector<8xf32>
    %212 = vector.multi_reduction <maximumf>, %211, %cst_113 [1] : vector<8x8xf32> to vector<8xf32>
    %213 = vector.shape_cast %212 : vector<8xf32> to vector<8x1xf32>
    %214 = vector.broadcast %213 : vector<8x1xf32> to vector<8x8xf32>
    %215 = arith.subf %211, %214 : vector<8x8xf32>
    %216 = math.exp %215 : vector<8x8xf32>
    %cst_114 = arith.constant dense<0.000000e+00> : vector<8xf32>
    %217 = vector.multi_reduction <add>, %216, %cst_114 [1] : vector<8x8xf32> to vector<8xf32>
    %218 = vector.shape_cast %217 : vector<8xf32> to vector<8x1xf32>
    %219 = vector.broadcast %218 : vector<8x1xf32> to vector<8x8xf32>
    %220 = arith.divf %216, %219 : vector<8x8xf32>
    "tpu.trace_start"() <{level = 10 : i32, message = "qk,kd->qd"}> : () -> ()
    %cst_115 = arith.constant dense<0.000000e+00> : vector<8x8xf32>
    %221 = tpu.matmul %220, %204, %cst_115 {dimension_numbers = #tpu.dot_dimension_numbers<[1], [0], [0], [1], [0, 0, 1, 1], [], []>} : vector<8x8xf32>, vector<8x8xf32>, vector<8x8xf32> -> vector<8x8xf32>
    "tpu.trace_stop"() : () -> ()
    %c0_116 = arith.constant 0 : index
    %c0_117 = arith.constant 0 : index
    %222 = vector.load %arg16[%c0_116, %c0_117] : memref<8x32xf32, #tpu.memory_space<vmem>>, vector<8x8xf32>
    tpu.vector_store %arg16[%c0_116, %c0_117], %221 {strides = array<i32>} : memref<8x32xf32, #tpu.memory_space<vmem>>, vector<8x8xf32>,
    %223 = vector.extract_strided_slice %201 {offsets = [0, 8], sizes = [8, 8], strides = [1, 1]} : vector<8x96xf32> to vector<8x8xf32>
    %224 = vector.extract_strided_slice %201 {offsets = [0, 40], sizes = [8, 8], strides = [1, 1]} : vector<8x96xf32> to vector<8x8xf32>
    %225 = vector.extract_strided_slice %201 {offsets = [0, 72], sizes = [8, 8], strides = [1, 1]} : vector<8x96xf32> to vector<8x8xf32>
    "tpu.trace_start"() <{level = 10 : i32, message = "qd,kd->qk"}> : () -> ()
    %cst_118 = arith.constant dense<0.000000e+00> : vector<8x8xf32>
    %226 = tpu.matmul %223, %224, %cst_118 {dimension_numbers = #tpu.dot_dimension_numbers<[1], [1], [0], [0], [0, 0, 1, 0], [], []>} : vector<8x8xf32>, vector<8x8xf32>, vector<8x8xf32> -> vector<8x8xf32>
    "tpu.trace_stop"() : () -> ()
    %cst_119 = arith.constant 0.353553385 : f32
    %227 = vector.broadcast %cst_119 : f32 to vector<8x8xf32>
    %228 = arith.mulf %226, %227 : vector<8x8xf32>
    %cst_120 = arith.constant -1.000000e+09 : f32
    %229 = vector.shape_cast %5 : vector<1x8xi1> to vector<1x8xi1>
    %230 = vector.broadcast %229 : vector<1x8xi1> to vector<8x8xi1>
    %231 = vector.broadcast %cst_120 : f32 to vector<8x8xf32>
    %232 = arith.select %230, %228, %231 : vector<8x8xi1>, vector<8x8xf32>
    %cst_121 = arith.constant dense<0xFF800000> : vector<8xf32>
    %233 = vector.multi_reduction <maximumf>, %232, %cst_121 [1] : vector<8x8xf32> to vector<8xf32>
    %234 = vector.shape_cast %233 : vector<8xf32> to vector<8x1xf32>
    %235 = vector.broadcast %234 : vector<8x1xf32> to vector<8x8xf32>
    %236 = arith.subf %232, %235 : vector<8x8xf32>
    %237 = math.exp %236 : vector<8x8xf32>
    %cst_122 = arith.constant dense<0.000000e+00> : vector<8xf32>
    %238 = vector.multi_reduction <add>, %237, %cst_122 [1] : vector<8x8xf32> to vector<8xf32>
    %239 = vector.shape_cast %238 : vector<8xf32> to vector<8x1xf32>
    %240 = vector.broadcast %239 : vector<8x1xf32> to vector<8x8xf32>
    %241 = arith.divf %237, %240 : vector<8x8xf32>
    "tpu.trace_start"() <{level = 10 : i32, message = "qk,kd->qd"}> : () -> ()
    %cst_123 = arith.constant dense<0.000000e+00> : vector<8x8xf32>
    %242 = tpu.matmul %241, %225, %cst_123 {dimension_numbers = #tpu.dot_dimension_numbers<[1], [0], [0], [1], [0, 0, 1, 1], [], []>} : vector<8x8xf32>, vector<8x8xf32>, vector<8x8xf32> -> vector<8x8xf32>
    "tpu.trace_stop"() : () -> ()
    %c0_124 = arith.constant 0 : index
    %c8_125 = arith.constant 8 : index
    %243 = vector.load %arg16[%c0_124, %c8_125] : memref<8x32xf32, #tpu.memory_space<vmem>>, vector<8x8xf32>
    tpu.vector_store %arg16[%c0_124, %c8_125], %242 {strides = array<i32>} : memref<8x32xf32, #tpu.memory_space<vmem>>, vector<8x8xf32>,
    %244 = vector.extract_strided_slice %201 {offsets = [0, 16], sizes = [8, 8], strides = [1, 1]} : vector<8x96xf32> to vector<8x8xf32>
    %245 = vector.extract_strided_slice %201 {offsets = [0, 48], sizes = [8, 8], strides = [1, 1]} : vector<8x96xf32> to vector<8x8xf32>
    %246 = vector.extract_strided_slice %201 {offsets = [0, 80], sizes = [8, 8], strides = [1, 1]} : vector<8x96xf32> to vector<8x8xf32>
    "tpu.trace_start"() <{level = 10 : i32, message = "qd,kd->qk"}> : () -> ()
    %cst_126 = arith.constant dense<0.000000e+00> : vector<8x8xf32>
    %247 = tpu.matmul %244, %245, %cst_126 {dimension_numbers = #tpu.dot_dimension_numbers<[1], [1], [0], [0], [0, 0, 1, 0], [], []>} : vector<8x8xf32>, vector<8x8xf32>, vector<8x8xf32> -> vector<8x8xf32>
    "tpu.trace_stop"() : () -> ()
    %cst_127 = arith.constant 0.353553385 : f32
    %248 = vector.broadcast %cst_127 : f32 to vector<8x8xf32>
    %249 = arith.mulf %247, %248 : vector<8x8xf32>
    %cst_128 = arith.constant -1.000000e+09 : f32
    %250 = vector.shape_cast %5 : vector<1x8xi1> to vector<1x8xi1>
    %251 = vector.broadcast %250 : vector<1x8xi1> to vector<8x8xi1>
    %252 = vector.broadcast %cst_128 : f32 to vector<8x8xf32>
    %253 = arith.select %251, %249, %252 : vector<8x8xi1>, vector<8x8xf32>
    %cst_129 = arith.constant dense<0xFF800000> : vector<8xf32>
    %254 = vector.multi_reduction <maximumf>, %253, %cst_129 [1] : vector<8x8xf32> to vector<8xf32>
    %255 = vector.shape_cast %254 : vector<8xf32> to vector<8x1xf32>
    %256 = vector.broadcast %255 : vector<8x1xf32> to vector<8x8xf32>
    %257 = arith.subf %253, %256 : vector<8x8xf32>
    %258 = math.exp %257 : vector<8x8xf32>
    %cst_130 = arith.constant dense<0.000000e+00> : vector<8xf32>
    %259 = vector.multi_reduction <add>, %258, %cst_130 [1] : vector<8x8xf32> to vector<8xf32>
    %260 = vector.shape_cast %259 : vector<8xf32> to vector<8x1xf32>
    %261 = vector.broadcast %260 : vector<8x1xf32> to vector<8x8xf32>
    %262 = arith.divf %258, %261 : vector<8x8xf32>
    "tpu.trace_start"() <{level = 10 : i32, message = "qk,kd->qd"}> : () -> ()
    %cst_131 = arith.constant dense<0.000000e+00> : vector<8x8xf32>
    %263 = tpu.matmul %262, %246, %cst_131 {dimension_numbers = #tpu.dot_dimension_numbers<[1], [0], [0], [1], [0, 0, 1, 1], [], []>} : vector<8x8xf32>, vector<8x8xf32>, vector<8x8xf32> -> vector<8x8xf32>
    "tpu.trace_stop"() : () -> ()
    %c0_132 = arith.constant 0 : index
    %c16_133 = arith.constant 16 : index
    %264 = vector.load %arg16[%c0_132, %c16_133] : memref<8x32xf32, #tpu.memory_space<vmem>>, vector<8x8xf32>
    tpu.vector_store %arg16[%c0_132, %c16_133], %263 {strides = array<i32>} : memref<8x32xf32, #tpu.memory_space<vmem>>, vector<8x8xf32>,
    %265 = vector.extract_strided_slice %201 {offsets = [0, 24], sizes = [8, 8], strides = [1, 1]} : vector<8x96xf32> to vector<8x8xf32>
    %266 = vector.extract_strided_slice %201 {offsets = [0, 56], sizes = [8, 8], strides = [1, 1]} : vector<8x96xf32> to vector<8x8xf32>
    %267 = vector.extract_strided_slice %201 {offsets = [0, 88], sizes = [8, 8], strides = [1, 1]} : vector<8x96xf32> to vector<8x8xf32>
    "tpu.trace_start"() <{level = 10 : i32, message = "qd,kd->qk"}> : () -> ()
    %cst_134 = arith.constant dense<0.000000e+00> : vector<8x8xf32>
    %268 = tpu.matmul %265, %266, %cst_134 {dimension_numbers = #tpu.dot_dimension_numbers<[1], [1], [0], [0], [0, 0, 1, 0], [], []>} : vector<8x8xf32>, vector<8x8xf32>, vector<8x8xf32> -> vector<8x8xf32>
    "tpu.trace_stop"() : () -> ()
    %cst_135 = arith.constant 0.353553385 : f32
    %269 = vector.broadcast %cst_135 : f32 to vector<8x8xf32>
    %270 = arith.mulf %268, %269 : vector<8x8xf32>
    %cst_136 = arith.constant -1.000000e+09 : f32
    %271 = vector.shape_cast %5 : vector<1x8xi1> to vector<1x8xi1>
    %272 = vector.broadcast %271 : vector<1x8xi1> to vector<8x8xi1>
    %273 = vector.broadcast %cst_136 : f32 to vector<8x8xf32>
    %274 = arith.select %272, %270, %273 : vector<8x8xi1>, vector<8x8xf32>
    %cst_137 = arith.constant dense<0xFF800000> : vector<8xf32>
    %275 = vector.multi_reduction <maximumf>, %274, %cst_137 [1] : vector<8x8xf32> to vector<8xf32>
    %276 = vector.shape_cast %275 : vector<8xf32> to vector<8x1xf32>
    %277 = vector.broadcast %276 : vector<8x1xf32> to vector<8x8xf32>
    %278 = arith.subf %274, %277 : vector<8x8xf32>
    %279 = math.exp %278 : vector<8x8xf32>
    %cst_138 = arith.constant dense<0.000000e+00> : vector<8xf32>
    %280 = vector.multi_reduction <add>, %279, %cst_138 [1] : vector<8x8xf32> to vector<8xf32>
    %281 = vector.shape_cast %280 : vector<8xf32> to vector<8x1xf32>
    %282 = vector.broadcast %281 : vector<8x1xf32> to vector<8x8xf32>
    %283 = arith.divf %279, %282 : vector<8x8xf32>
    "tpu.trace_start"() <{level = 10 : i32, message = "qk,kd->qd"}> : () -> ()
    %cst_139 = arith.constant dense<0.000000e+00> : vector<8x8xf32>
    %284 = tpu.matmul %283, %267, %cst_139 {dimension_numbers = #tpu.dot_dimension_numbers<[1], [0], [0], [1], [0, 0, 1, 1], [], []>} : vector<8x8xf32>, vector<8x8xf32>, vector<8x8xf32> -> vector<8x8xf32>
    "tpu.trace_stop"() : () -> ()
    %c0_140 = arith.constant 0 : index
    %c24_141 = arith.constant 24 : index
    %285 = vector.load %arg16[%c0_140, %c24_141] : memref<8x32xf32, #tpu.memory_space<vmem>>, vector<8x8xf32>
    tpu.vector_store %arg16[%c0_140, %c24_141], %284 {strides = array<i32>} : memref<8x32xf32, #tpu.memory_space<vmem>>, vector<8x8xf32>,
    %c0_142 = arith.constant 0 : index
    %c0_143 = arith.constant 0 : index
    %286 = vector.load %arg16[%c0_142, %c0_143] : memref<8x32xf32, #tpu.memory_space<vmem>>, vector<8x32xf32>
    %c1_144 = arith.constant 1 : index
    %c0_145 = arith.constant 0 : index
    %c0_146 = arith.constant 0 : index
    %287 = vector.load %arg5[%c1_144, %c0_145, %c0_146] : memref<2x32x32xf32, #tpu.memory_space<vmem>>, vector<1x32x32xf32>
    %288 = vector.shape_cast %287 : vector<1x32x32xf32> to vector<32x32xf32>
    %cst_147 = arith.constant dense<0.000000e+00> : vector<8x32xf32>
    %289 = tpu.matmul %286, %288, %cst_147 {dimension_numbers = #tpu.dot_dimension_numbers<[1], [0], [0], [1], [0, 0, 1, 1], [], []>} : vector<8x32xf32>, vector<32x32xf32>, vector<8x32xf32> -> vector<8x32xf32>
    %c1_148 = arith.constant 1 : index
    %c0_149 = arith.constant 0 : index
    %c0_150 = arith.constant 0 : index
    %290 = vector.load %arg6[%c1_148, %c0_149, %c0_150] : memref<2x1x32xf32, #tpu.memory_space<vmem>>, vector<1x1x32xf32>
    %291 = vector.shape_cast %290 : vector<1x1x32xf32> to vector<1x32xf32>
    %292 = vector.broadcast %291 : vector<1x32xf32> to vector<8x32xf32>
    %293 = arith.addf %289, %292 : vector<8x32xf32>
    %294 = arith.addf %170, %293 : vector<8x32xf32>
    %c1_151 = arith.constant 1 : index
    %c1_152 = arith.constant 1 : index
    %c0_153 = arith.constant 0 : index
    %c0_154 = arith.constant 0 : index
    %295 = vector.load %arg11[%c1_151, %c1_152, %c0_153, %c0_154] : memref<2x2x1x32xf32, #tpu.memory_space<vmem>>, vector<1x1x1x32xf32>
    %296 = vector.shape_cast %295 : vector<1x1x1x32xf32> to vector<1x32xf32>
    %c1_155 = arith.constant 1 : index
    %c1_156 = arith.constant 1 : index
    %c0_157 = arith.constant 0 : index
    %c0_158 = arith.constant 0 : index
    %297 = vector.load %arg12[%c1_155, %c1_156, %c0_157, %c0_158] : memref<2x2x1x32xf32, #tpu.memory_space<vmem>>, vector<1x1x1x32xf32>
    %298 = vector.shape_cast %297 : vector<1x1x1x32xf32> to vector<1x32xf32>
    %cst_159 = arith.constant dense<0.000000e+00> : vector<8xf32>
    %299 = vector.multi_reduction <add>, %294, %cst_159 [1] : vector<8x32xf32> to vector<8xf32>
    %300 = vector.shape_cast %299 : vector<8xf32> to vector<8x1xf32>
    %cst_160 = arith.constant 3.200000e+01 : f32
    %301 = vector.broadcast %cst_160 : f32 to vector<8x1xf32>
    %302 = arith.divf %300, %301 : vector<8x1xf32>
    %303 = vector.broadcast %302 : vector<8x1xf32> to vector<8x32xf32>
    %304 = arith.subf %294, %303 : vector<8x32xf32>
    %305 = arith.mulf %304, %304 : vector<8x32xf32>
    %cst_161 = arith.constant dense<0.000000e+00> : vector<8xf32>
    %306 = vector.multi_reduction <add>, %305, %cst_161 [1] : vector<8x32xf32> to vector<8xf32>
    %307 = vector.shape_cast %306 : vector<8xf32> to vector<8x1xf32>
    %cst_162 = arith.constant 3.100000e+01 : f32
    %308 = vector.broadcast %cst_162 : f32 to vector<8x1xf32>
    %309 = arith.divf %307, %308 : vector<8x1xf32>
    %310 = vector.broadcast %296 : vector<1x32xf32> to vector<8x32xf32>
    %311 = arith.mulf %310, %304 : vector<8x32xf32>
    %312 = math.sqrt %309 : vector<8x1xf32>
    %cst_163 = arith.constant 9.99999997E-7 : f32
    %313 = vector.broadcast %cst_163 : f32 to vector<8x1xf32>
    %314 = arith.addf %312, %313 : vector<8x1xf32>
    %315 = vector.broadcast %314 : vector<8x1xf32> to vector<8x32xf32>
    %316 = arith.divf %311, %315 : vector<8x32xf32>
    %317 = vector.broadcast %298 : vector<1x32xf32> to vector<8x32xf32>
    %318 = arith.addf %316, %317 : vector<8x32xf32>
    %c1_164 = arith.constant 1 : index
    %c0_165 = arith.constant 0 : index
    %c0_166 = arith.constant 0 : index
    %319 = vector.load %arg7[%c1_164, %c0_165, %c0_166] : memref<2x32x64xf32, #tpu.memory_space<vmem>>, vector<1x32x64xf32>
    %320 = vector.shape_cast %319 : vector<1x32x64xf32> to vector<32x64xf32>
    %cst_167 = arith.constant dense<0.000000e+00> : vector<8x64xf32>
    %321 = tpu.matmul %318, %320, %cst_167 {dimension_numbers = #tpu.dot_dimension_numbers<[1], [0], [0], [1], [0, 0, 1, 1], [], []>} : vector<8x32xf32>, vector<32x64xf32>, vector<8x64xf32> -> vector<8x64xf32>
    %c1_168 = arith.constant 1 : index
    %c0_169 = arith.constant 0 : index
    %c0_170 = arith.constant 0 : index
    %322 = vector.load %arg8[%c1_168, %c0_169, %c0_170] : memref<2x1x64xf32, #tpu.memory_space<vmem>>, vector<1x1x64xf32>
    %323 = vector.shape_cast %322 : vector<1x1x64xf32> to vector<1x64xf32>
    %324 = vector.broadcast %323 : vector<1x64xf32> to vector<8x64xf32>
    %325 = arith.addf %321, %324 : vector<8x64xf32>
    %cst_171 = arith.constant 0.000000e+00 : f32
    %326 = vector.broadcast %cst_171 : f32 to vector<8x64xf32>
    %327 = arith.maximumf %325, %326 : vector<8x64xf32>
    %c1_172 = arith.constant 1 : index
    %c0_173 = arith.constant 0 : index
    %c0_174 = arith.constant 0 : index
    %328 = vector.load %arg9[%c1_172, %c0_173, %c0_174] : memref<2x64x32xf32, #tpu.memory_space<vmem>>, vector<1x64x32xf32>
    %329 = vector.shape_cast %328 : vector<1x64x32xf32> to vector<64x32xf32>
    %cst_175 = arith.constant dense<0.000000e+00> : vector<8x32xf32>
    %330 = tpu.matmul %327, %329, %cst_175 {dimension_numbers = #tpu.dot_dimension_numbers<[1], [0], [0], [1], [0, 0, 1, 1], [], []>} : vector<8x64xf32>, vector<64x32xf32>, vector<8x32xf32> -> vector<8x32xf32>
    %331 = arith.addf %294, %330 : vector<8x32xf32>
    %c1_176 = arith.constant 1 : index
    %c0_177 = arith.constant 0 : index
    %c0_178 = arith.constant 0 : index
    %332 = vector.load %arg10[%c1_176, %c0_177, %c0_178] : memref<2x1x32xf32, #tpu.memory_space<vmem>>, vector<1x1x32xf32>
    %333 = vector.shape_cast %332 : vector<1x1x32xf32> to vector<1x32xf32>
    %334 = vector.broadcast %333 : vector<1x32xf32> to vector<8x32xf32>
    %335 = arith.addf %331, %334 : vector<8x32xf32>
    %c0_179 = arith.constant 0 : index
    %c0_180 = arith.constant 0 : index
    %336 = vector.load %arg13[%c0_179, %c0_180] : memref<1x32xf32, #tpu.memory_space<vmem>>, vector<1x32xf32>
    %c0_181 = arith.constant 0 : index
    %c0_182 = arith.constant 0 : index
    %337 = vector.load %arg14[%c0_181, %c0_182] : memref<1x32xf32, #tpu.memory_space<vmem>>, vector<1x32xf32>
    %cst_183 = arith.constant dense<0.000000e+00> : vector<8xf32>
    %338 = vector.multi_reduction <add>, %335, %cst_183 [1] : vector<8x32xf32> to vector<8xf32>
    %339 = vector.shape_cast %338 : vector<8xf32> to vector<8x1xf32>
    %cst_184 = arith.constant 3.200000e+01 : f32
    %340 = vector.broadcast %cst_184 : f32 to vector<8x1xf32>
    %341 = arith.divf %339, %340 : vector<8x1xf32>
    %342 = vector.broadcast %341 : vector<8x1xf32> to vector<8x32xf32>
    %343 = arith.subf %335, %342 : vector<8x32xf32>
    %344 = arith.mulf %343, %343 : vector<8x32xf32>
    %cst_185 = arith.constant dense<0.000000e+00> : vector<8xf32>
    %345 = vector.multi_reduction <add>, %344, %cst_185 [1] : vector<8x32xf32> to vector<8xf32>
    %346 = vector.shape_cast %345 : vector<8xf32> to vector<8x1xf32>
    %cst_186 = arith.constant 3.100000e+01 : f32
    %347 = vector.broadcast %cst_186 : f32 to vector<8x1xf32>
    %348 = arith.divf %346, %347 : vector<8x1xf32>
    %349 = vector.broadcast %336 : vector<1x32xf32> to vector<8x32xf32>
    %350 = arith.mulf %349, %343 : vector<8x32xf32>
    %351 = math.sqrt %348 : vector<8x1xf32>
    %cst_187 = arith.constant 9.99999997E-7 : f32
    %352 = vector.broadcast %cst_187 : f32 to vector<8x1xf32>
    %353 = arith.addf %351, %352 : vector<8x1xf32>
    %354 = vector.broadcast %353 : vector<8x1xf32> to vector<8x32xf32>
    %355 = arith.divf %350, %354 : vector<8x32xf32>
    %356 = vector.broadcast %337 : vector<1x32xf32> to vector<8x32xf32>
    %357 = arith.addf %355, %356 : vector<8x32xf32>
    %c0_188 = arith.constant 0 : index
    %c0_189 = arith.constant 0 : index
    %c0_190 = arith.constant 0 : index
    %358 = vector.load %arg15[%c0_188, %c0_189, %c0_190] : memref<1x8x32xf32, #tpu.memory_space<vmem>>, vector<1x8x32xf32>
    %359 = vector.shape_cast %358 : vector<1x8x32xf32> to vector<8x32xf32>
    %360 = vector.shape_cast %357 : vector<8x32xf32> to vector<1x8x32xf32>
    tpu.vector_store %arg15[%c0_188, %c0_189, %c0_190], %360 {strides = array<i32>} : memref<1x8x32xf32, #tpu.memory_space<vmem>>, vector<1x8x32xf32>,
    return
  }
  func.func @transform_0(%arg0: i32) -> (i32, i32, i32) {
    %c0_i32 = arith.constant 0 : i32
    %c0_i32_0 = arith.constant 0 : i32
    %c0_i32_1 = arith.constant 0 : i32
    return %arg0, %c0_i32, %c0_i32_0 : i32, i32, i32
  }
  func.func @transform_1(%arg0: i32) -> (i32, i32, i32) {
    %c0_i32 = arith.constant 0 : i32
    %c0_i32_0 = arith.constant 0 : i32
    %c0_i32_1 = arith.constant 0 : i32
    return %arg0, %c0_i32, %c0_i32_0 : i32, i32, i32
  }
  func.func @transform_2(%arg0: i32) -> (i32, i32, i32) {
    %c0_i32 = arith.constant 0 : i32
    %c0_i32_0 = arith.constant 0 : i32
    %c0_i32_1 = arith.constant 0 : i32
    %c0_i32_2 = arith.constant 0 : i32
    return %c0_i32, %c0_i32_0, %c0_i32_1 : i32, i32, i32
  }
  func.func @transform_3(%arg0: i32) -> (i32, i32, i32) {
    %c0_i32 = arith.constant 0 : i32
    %c0_i32_0 = arith.constant 0 : i32
    %c0_i32_1 = arith.constant 0 : i32
    %c0_i32_2 = arith.constant 0 : i32
    return %c0_i32, %c0_i32_0, %c0_i32_1 : i32, i32, i32
  }
  func.func @transform_4(%arg0: i32) -> (i32, i32, i32) {
    %c0_i32 = arith.constant 0 : i32
    %c0_i32_0 = arith.constant 0 : i32
    %c0_i32_1 = arith.constant 0 : i32
    %c0_i32_2 = arith.constant 0 : i32
    return %c0_i32, %c0_i32_0, %c0_i32_1 : i32, i32, i32
  }
  func.func @transform_5(%arg0: i32) -> (i32, i32, i32) {
    %c0_i32 = arith.constant 0 : i32
    %c0_i32_0 = arith.constant 0 : i32
    %c0_i32_1 = arith.constant 0 : i32
    %c0_i32_2 = arith.constant 0 : i32
    return %c0_i32, %c0_i32_0, %c0_i32_1 : i32, i32, i32
  }
  func.func @transform_6(%arg0: i32) -> (i32, i32, i32) {
    %c0_i32 = arith.constant 0 : i32
    %c0_i32_0 = arith.constant 0 : i32
    %c0_i32_1 = arith.constant 0 : i32
    %c0_i32_2 = arith.constant 0 : i32
    return %c0_i32, %c0_i32_0, %c0_i32_1 : i32, i32, i32
  }
  func.func @transform_7(%arg0: i32) -> (i32, i32, i32) {
    %c0_i32 = arith.constant 0 : i32
    %c0_i32_0 = arith.constant 0 : i32
    %c0_i32_1 = arith.constant 0 : i32
    %c0_i32_2 = arith.constant 0 : i32
    return %c0_i32, %c0_i32_0, %c0_i32_1 : i32, i32, i32
  }
  func.func @transform_8(%arg0: i32) -> (i32, i32, i32) {
    %c0_i32 = arith.constant 0 : i32
    %c0_i32_0 = arith.constant 0 : i32
    %c0_i32_1 = arith.constant 0 : i32
    %c0_i32_2 = arith.constant 0 : i32
    return %c0_i32, %c0_i32_0, %c0_i32_1 : i32, i32, i32
  }
  func.func @transform_9(%arg0: i32) -> (i32, i32, i32) {
    %c0_i32 = arith.constant 0 : i32
    %c0_i32_0 = arith.constant 0 : i32
    %c0_i32_1 = arith.constant 0 : i32
    %c0_i32_2 = arith.constant 0 : i32
    return %c0_i32, %c0_i32_0, %c0_i32_1 : i32, i32, i32
  }
  func.func @transform_10(%arg0: i32) -> (i32, i32, i32, i32) {
    %c0_i32 = arith.constant 0 : i32
    %c0_i32_0 = arith.constant 0 : i32
    %c0_i32_1 = arith.constant 0 : i32
    %c0_i32_2 = arith.constant 0 : i32
    %c0_i32_3 = arith.constant 0 : i32
    return %c0_i32, %c0_i32_0, %c0_i32_1, %c0_i32_2 : i32, i32, i32, i32
  }
  func.func @transform_11(%arg0: i32) -> (i32, i32, i32, i32) {
    %c0_i32 = arith.constant 0 : i32
    %c0_i32_0 = arith.constant 0 : i32
    %c0_i32_1 = arith.constant 0 : i32
    %c0_i32_2 = arith.constant 0 : i32
    %c0_i32_3 = arith.constant 0 : i32
    return %c0_i32, %c0_i32_0, %c0_i32_1, %c0_i32_2 : i32, i32, i32, i32
  }
  func.func @transform_12(%arg0: i32) -> (i32, i32) {
    %c0_i32 = arith.constant 0 : i32
    %c0_i32_0 = arith.constant 0 : i32
    %c0_i32_1 = arith.constant 0 : i32
    return %c0_i32, %c0_i32_0 : i32, i32
  }
  func.func @transform_13(%arg0: i32) -> (i32, i32) {
    %c0_i32 = arith.constant 0 : i32
    %c0_i32_0 = arith.constant 0 : i32
    %c0_i32_1 = arith.constant 0 : i32
    return %c0_i32, %c0_i32_0 : i32, i32
  }
  func.func @transform_14(%arg0: i32) -> (i32, i32, i32) {
    %c0_i32 = arith.constant 0 : i32
    %c0_i32_0 = arith.constant 0 : i32
    %c0_i32_1 = arith.constant 0 : i32
    return %arg0, %c0_i32, %c0_i32_0 : i32, i32, i32
  }
}

</mosaic_0001>

<llo_original>
// kernel: encoder_forward.1
$region0: #{encoder_forward.1}
  #allocation0 [shape = 'u32[]', space=smem, size = 0x4, offset = 0x4, fixed_abs, tag = 'smem constant byte address 0x4 - core index']
  #allocation1 [shape = 'u32[72,128]{1,0:T(1,128)}', space=vmem, size = 0x9000, scoped, tag = 'internal scratch']
  #allocation2 [shape = 'f32[8,32]{1,0:T(8,128)}', space=vmem, size = 0x1000, scoped, tag = 'scratch operand']
  %s0 = inlined_call_operand.hbm [shape: f32[2,8,32], index: 0, kind: input, shape index: {}]
  %s1 = inlined_call_operand.hbm [shape: f32[2,1,8], index: 1, kind: input, shape index: {}]
  %s2 = inlined_call_operand.vmem [shape: f32[2,32,96], index: 2, kind: input, shape index: {}]
  %s3 = inlined_call_operand.hbm [shape: f32[2,1,96], index: 3, kind: input, shape index: {}]
  %s4 = inlined_call_operand.vmem [shape: f32[2,32,32], index: 4, kind: input, shape index: {}]
  %s5 = inlined_call_operand.hbm [shape: f32[2,1,32], index: 5, kind: input, shape index: {}]
  %s6 = inlined_call_operand.vmem [shape: f32[2,32,64], index: 6, kind: input, shape index: {}]
  %s7 = inlined_call_operand.hbm [shape: f32[2,1,64], index: 7, kind: input, shape index: {}]
  %s8 = inlined_call_operand.vmem [shape: f32[2,64,32], index: 8, kind: input, shape index: {}]
  %s9 = inlined_call_operand.hbm [shape: f32[2,1,32], index: 9, kind: input, shape index: {}]
  %s10 = inlined_call_operand.vmem [shape: f32[2,2,1,32], index: 10, kind: input, shape index: {}]
  %s11 = inlined_call_operand.vmem [shape: f32[2,2,1,32], index: 11, kind: input, shape index: {}]
  %s12 = inlined_call_operand.vmem [shape: f32[1,32], index: 12, kind: input, shape index: {}]
  %s13 = inlined_call_operand.vmem [shape: f32[1,32], index: 13, kind: input, shape index: {}]
  %s14 = inlined_call_operand.hbm [shape: f32[2,8,32], index: 14, kind: output, shape index: {}]
  %s15 = sld [smem:[#allocation0]]
  $region113: #{encoder_forward.1} parent=0
    _
  %s17 = ssub.s32 1, %s15
  %s18 = scalar_select 0, %s17, %s15
  $region1: #{encoder_forward.1} parent=0
    #allocation3 [shape = 'u8[8192]{0}', space=vmem, size = 0x2000, scoped, tag = 'input window, operand 0']
    #allocation4 [shape = 's32[2]{0}', space=sflag, size = 0x8, scoped, tag = 'scoped memory for encoder_forward.1']
    #allocation5 [shape = 's32[2]{0}', space=sflag, size = 0x8, scoped, tag = 'scoped memory for encoder_forward.1']
    #allocation6 [shape = 'u8[1024]{0}', space=vmem, size = 0x400, scoped, tag = 'input window, operand 1']
    #allocation7 [shape = 's32[2]{0}', space=sflag, size = 0x8, scoped, tag = 'scoped memory for encoder_forward.1']
    #allocation8 [shape = 'u8[1024]{0}', space=vmem, size = 0x400, scoped, tag = 'input window, operand 3, single buffered']
    #allocation9 [shape = 'u8[1024]{0}', space=vmem, size = 0x400, scoped, tag = 'input window, operand 5, single buffered']
    #allocation10 [shape = 's32[1]{0}', space=sflag, size = 0x4, scoped, tag = 'scoped memory for encoder_forward.1']
    #allocation11 [shape = 'u8[1024]{0}', space=vmem, size = 0x400, scoped, tag = 'input window, operand 7, single buffered']
    #allocation12 [shape = 'u8[1024]{0}', space=vmem, size = 0x400, scoped, tag = 'input window, operand 9, single buffered']
    #allocation13 [shape = 's32[1]{0}', space=sflag, size = 0x4, scoped, tag = 'scoped memory for encoder_forward.1']
    #allocation14 [shape = 'u8[8192]{0}', space=vmem, size = 0x2000, scoped, tag = 'output window, operand 0']
    %19 = vsyncpa [#allocation4], 0
    %s20 = scalar_lea.sflag [#allocation4], 1
    %21 = vsyncpa %s20, 0
    %22 = vsyncpa [#allocation7], 0
    %s23 = scalar_lea.sflag [#allocation7], 1
    %24 = vsyncpa %s23, 0
    %25 = vsyncpa [#allocation10], 0
    %26 = vsyncpa [#allocation13], 0
    %27 = vsyncpa [#allocation5], 0
    %s28 = scalar_lea.sflag [#allocation5], 1
    %29 = vsyncpa %s28, 0
    loop: start=0, step=1, limit=4
    $region2: #{encoder_forward.1} parent=1 // loop_pre_header
      _
    $region3: #{encoder_forward.1} parent=1 // loop_header
      %s31 = sphi 0, %s35
      %p32 = scmp.ge.s32.totalorder %s31, 4
      %s41 = sphi 0, %s43
      %s44 = sphi 0, %s41
      %s45 = sphi 0, %s44
      %s61 = sphi 0, %s45
      %s67 = sphi 0, %s69
      %s70 = sphi 0, %s67
      %s71 = sphi 0, %s70
      %s87 = sphi 0, %s71
      %s91 = sphi 0, %s91
      %s93 = sphi 0, %s91
      %s94 = sphi 0, %s93
      %s108 = sphi 0, %s94
      %s112 = sphi 0, %s112
      %s114 = sphi 0, %s112
      %s115 = sphi 0, %s114
      %s129 = sphi 0, %s115
      %s133 = sphi 0, %s133
      %s135 = sphi 0, %s133
      %s136 = sphi 0, %s135
      %s150 = sphi 0, %s136
      %s154 = sphi 0, %s154
      %s156 = sphi 0, %s154
      %s157 = sphi 0, %s156
      %s171 = sphi 0, %s157
      %s175 = sphi 0, %s175
      %s177 = sphi 0, %s175
      %s178 = sphi 0, %s177
      %s192 = sphi 0, %s178
      %s196 = sphi 0, %s196
      %s198 = sphi 0, %s196
      %s199 = sphi 0, %s198
      %s213 = sphi 0, %s199
      %s217 = sphi 0, %s217
      %s219 = sphi 0, %s217
      %s220 = sphi 0, %s219
      %s234 = sphi 0, %s220
      %s238 = sphi 0, %s238
      %s240 = sphi 0, %s238
      %s241 = sphi 0, %s240
      %s255 = sphi 0, %s241
      %s259 = sphi 0, %s259
      %s261 = sphi 0, %s259
      %s262 = sphi 0, %s261
      %s276 = sphi 0, %s262
      %s280 = sphi 0, %s280
      %s282 = sphi 0, %s280
      %s283 = sphi 0, %s282
      %s297 = sphi 0, %s283
      %s301 = sphi 0, %s301
      %s303 = sphi 0, %s301
      %s304 = sphi 0, %s303
      %s318 = sphi 0, %s304
      %s322 = sphi 0, %s322
      %s324 = sphi 0, %s322
      %s325 = sphi 0, %s324
      %s339 = sphi 0, %s325
      %s345 = sphi 0, %s347
      %s348 = sphi 0, %s345
      %s349 = sphi 0, %s348
      %s365 = sphi 0, %s349
    $region4: #{encoder_forward.1} parent=1 // loop_header_branch
      %34 = sbr.rel (%p32) target = $region8
    $region5: #{encoder_forward.1} parent=1 // loop_body
      %s36 = ssub.s32 %s31, 1
      %s37 = ssub.s32 %s31, 2
      %s38 = sadd.s32 %s31, 1
      %s39 = ssub.s32 %s31, %s38
      %p40 = scmp.eq.s32.totalorder %s39, 0
      %s42 = sadd.s32 %s41, 1
      %s43 = scalar_select %p40, %s41, %s42
      %p46 = pneg %p40
      %p47 = scmp.eq.s32.totalorder %s31, 1
      %p48 = por %p46, %p47
      %p49 = scmp.ne.s32.totalorder %s41, %s44
      %p50 = scmp.eq.s32.totalorder %s31, 0
      %p51 = por %p49, %p50
      %p52 = scmp.ne.s32.totalorder %s41, %s44
      %p53 = scmp.eq.s32.totalorder %s36, 1
      %p54 = por %p52, %p53
      %p55 = scmp.ne.s32.totalorder %s44, %s45
      %p56 = scmp.eq.s32.totalorder %s36, 0
      %p57 = por %p55, %p56
      %p58 = scmp.ne.s32.totalorder %s44, %s45
      %p59 = scmp.eq.s32.totalorder %s37, 1
      %p60 = por %p58, %p59
      %p62 = scmp.ne.s32.totalorder %s45, %s61
      %p63 = scmp.eq.s32.totalorder %s37, 0
      %p64 = por %p62, %p63
      %s65 = ssub.s32 %s31, %s38
      %p66 = scmp.eq.s32.totalorder %s65, 0
      %s68 = sadd.s32 %s67, 1
      %s69 = scalar_select %p66, %s67, %s68
      %p72 = pneg %p66
      %p73 = scmp.eq.s32.totalorder %s31, 1
      %p74 = por %p72, %p73
      %p75 = scmp.ne.s32.totalorder %s67, %s70
      %p76 = scmp.eq.s32.totalorder %s31, 0
      %p77 = por %p75, %p76
      %p78 = scmp.ne.s32.totalorder %s67, %s70
      %p79 = scmp.eq.s32.totalorder %s36, 1
      %p80 = por %p78, %p79
      %p81 = scmp.ne.s32.totalorder %s70, %s71
      %p82 = scmp.eq.s32.totalorder %s36, 0
      %p83 = por %p81, %p82
      %p84 = scmp.ne.s32.totalorder %s70, %s71
      %p85 = scmp.eq.s32.totalorder %s37, 1
      %p86 = por %p84, %p85
      %p88 = scmp.ne.s32.totalorder %s71, %s87
      %p89 = scmp.eq.s32.totalorder %s37, 0
      %p90 = por %p88, %p89
      %s92 = sadd.s32 %s91, 1
      %p95 = scmp.eq.s32.totalorder %s31, 1
      %p96 = scmp.ne.s32.totalorder %s91, %s93
      %p97 = scmp.eq.s32.totalorder %s31, 0
      %p98 = por %p96, %p97
      %p99 = scmp.ne.s32.totalorder %s91, %s93
      %p100 = scmp.eq.s32.totalorder %s36, 1
      %p101 = por %p99, %p100
      %p102 = scmp.ne.s32.totalorder %s93, %s94
      %p103 = scmp.eq.s32.totalorder %s36, 0
      %p104 = por %p102, %p103
      %p105 = scmp.ne.s32.totalorder %s93, %s94
      %p106 = scmp.eq.s32.totalorder %s37, 1
      %p107 = por %p105, %p106
      %p109 = scmp.ne.s32.totalorder %s94, %s108
      %p110 = scmp.eq.s32.totalorder %s37, 0
      %p111 = por %p109, %p110
      %s113 = sadd.s32 %s112, 1
      %p116 = scmp.eq.s32.totalorder %s31, 1
      %p117 = scmp.ne.s32.totalorder %s112, %s114
      %p118 = scmp.eq.s32.totalorder %s31, 0
      %p119 = por %p117, %p118
      %p120 = scmp.ne.s32.totalorder %s112, %s114
      %p121 = scmp.eq.s32.totalorder %s36, 1
      %p122 = por %p120, %p121
      %p123 = scmp.ne.s32.totalorder %s114, %s115
      %p124 = scmp.eq.s32.totalorder %s36, 0
      %p125 = por %p123, %p124
      %p126 = scmp.ne.s32.totalorder %s114, %s115
      %p127 = scmp.eq.s32.totalorder %s37, 1
      %p128 = por %p126, %p127
      %p130 = scmp.ne.s32.totalorder %s115, %s129
      %p131 = scmp.eq.s32.totalorder %s37, 0
      %p132 = por %p130, %p131
      %s134 = sadd.s32 %s133, 1
      %p137 = scmp.eq.s32.totalorder %s31, 1
      %p138 = scmp.ne.s32.totalorder %s133, %s135
      %p139 = scmp.eq.s32.totalorder %s31, 0
      %p140 = por %p138, %p139
      %p141 = scmp.ne.s32.totalorder %s133, %s135
      %p142 = scmp.eq.s32.totalorder %s36, 1
      %p143 = por %p141, %p142
      %p144 = scmp.ne.s32.totalorder %s135, %s136
      %p145 = scmp.eq.s32.totalorder %s36, 0
      %p146 = por %p144, %p145
      %p147 = scmp.ne.s32.totalorder %s135, %s136
      %p148 = scmp.eq.s32.totalorder %s37, 1
      %p149 = por %p147, %p148
      %p151 = scmp.ne.s32.totalorder %s136, %s150
      %p152 = scmp.eq.s32.totalorder %s37, 0
      %p153 = por %p151, %p152
      %s155 = sadd.s32 %s154, 1
      %p158 = scmp.eq.s32.totalorder %s31, 1
      %p159 = scmp.ne.s32.totalorder %s154, %s156
      %p160 = scmp.eq.s32.totalorder %s31, 0
      %p161 = por %p159, %p160
      %p162 = scmp.ne.s32.totalorder %s154, %s156
      %p163 = scmp.eq.s32.totalorder %s36, 1
      %p164 = por %p162, %p163
      %p165 = scmp.ne.s32.totalorder %s156, %s157
      %p166 = scmp.eq.s32.totalorder %s36, 0
      %p167 = por %p165, %p166
      %p168 = scmp.ne.s32.totalorder %s156, %s157
      %p169 = scmp.eq.s32.totalorder %s37, 1
      %p170 = por %p168, %p169
      %p172 = scmp.ne.s32.totalorder %s157, %s171
      %p173 = scmp.eq.s32.totalorder %s37, 0
      %p174 = por %p172, %p173
      %s176 = sadd.s32 %s175, 1
      %p179 = scmp.eq.s32.totalorder %s31, 1
      %p180 = scmp.ne.s32.totalorder %s175, %s177
      %p181 = scmp.eq.s32.totalorder %s31, 0
      %p182 = por %p180, %p181
      %p183 = scmp.ne.s32.totalorder %s175, %s177
      %p184 = scmp.eq.s32.totalorder %s36, 1
      %p185 = por %p183, %p184
      %p186 = scmp.ne.s32.totalorder %s177, %s178
      %p187 = scmp.eq.s32.totalorder %s36, 0
      %p188 = por %p186, %p187
      %p189 = scmp.ne.s32.totalorder %s177, %s178
      %p190 = scmp.eq.s32.totalorder %s37, 1
      %p191 = por %p189, %p190
      %p193 = scmp.ne.s32.totalorder %s178, %s192
      %p194 = scmp.eq.s32.totalorder %s37, 0
      %p195 = por %p193, %p194
      %s197 = sadd.s32 %s196, 1
      %p200 = scmp.eq.s32.totalorder %s31, 1
      %p201 = scmp.ne.s32.totalorder %s196, %s198
      %p202 = scmp.eq.s32.totalorder %s31, 0
      %p203 = por %p201, %p202
      %p204 = scmp.ne.s32.totalorder %s196, %s198
      %p205 = scmp.eq.s32.totalorder %s36, 1
      %p206 = por %p204, %p205
      %p207 = scmp.ne.s32.totalorder %s198, %s199
      %p208 = scmp.eq.s32.totalorder %s36, 0
      %p209 = por %p207, %p208
      %p210 = scmp.ne.s32.totalorder %s198, %s199
      %p211 = scmp.eq.s32.totalorder %s37, 1
      %p212 = por %p210, %p211
      %p214 = scmp.ne.s32.totalorder %s199, %s213
      %p215 = scmp.eq.s32.totalorder %s37, 0
      %p216 = por %p214, %p215
      %s218 = sadd.s32 %s217, 1
      %p221 = scmp.eq.s32.totalorder %s31, 1
      %p222 = scmp.ne.s32.totalorder %s217, %s219
      %p223 = scmp.eq.s32.totalorder %s31, 0
      %p224 = por %p222, %p223
      %p225 = scmp.ne.s32.totalorder %s217, %s219
      %p226 = scmp.eq.s32.totalorder %s36, 1
      %p227 = por %p225, %p226
      %p228 = scmp.ne.s32.totalorder %s219, %s220
      %p229 = scmp.eq.s32.totalorder %s36, 0
      %p230 = por %p228, %p229
      %p231 = scmp.ne.s32.totalorder %s219, %s220
      %p232 = scmp.eq.s32.totalorder %s37, 1
      %p233 = por %p231, %p232
      %p235 = scmp.ne.s32.totalorder %s220, %s234
      %p236 = scmp.eq.s32.totalorder %s37, 0
      %p237 = por %p235, %p236
      %s239 = sadd.s32 %s238, 1
      %p242 = scmp.eq.s32.totalorder %s31, 1
      %p243 = scmp.ne.s32.totalorder %s238, %s240
      %p244 = scmp.eq.s32.totalorder %s31, 0
      %p245 = por %p243, %p244
      %p246 = scmp.ne.s32.totalorder %s238, %s240
      %p247 = scmp.eq.s32.totalorder %s36, 1
      %p248 = por %p246, %p247
      %p249 = scmp.ne.s32.totalorder %s240, %s241
      %p250 = scmp.eq.s32.totalorder %s36, 0
      %p251 = por %p249, %p250
      %p252 = scmp.ne.s32.totalorder %s240, %s241
      %p253 = scmp.eq.s32.totalorder %s37, 1
      %p254 = por %p252, %p253
      %p256 = scmp.ne.s32.totalorder %s241, %s255
      %p257 = scmp.eq.s32.totalorder %s37, 0
      %p258 = por %p256, %p257
      %s260 = sadd.s32 %s259, 1
      %p263 = scmp.eq.s32.totalorder %s31, 1
      %p264 = scmp.ne.s32.totalorder %s259, %s261
      %p265 = scmp.eq.s32.totalorder %s31, 0
      %p266 = por %p264, %p265
      %p267 = scmp.ne.s32.totalorder %s259, %s261
      %p268 = scmp.eq.s32.totalorder %s36, 1
      %p269 = por %p267, %p268
      %p270 = scmp.ne.s32.totalorder %s261, %s262
      %p271 = scmp.eq.s32.totalorder %s36, 0
      %p272 = por %p270, %p271
      %p273 = scmp.ne.s32.totalorder %s261, %s262
      %p274 = scmp.eq.s32.totalorder %s37, 1
      %p275 = por %p273, %p274
      %p277 = scmp.ne.s32.totalorder %s262, %s276
      %p278 = scmp.eq.s32.totalorder %s37, 0
      %p279 = por %p277, %p278
      %s281 = sadd.s32 %s280, 1
      %p284 = scmp.eq.s32.totalorder %s31, 1
      %p285 = scmp.ne.s32.totalorder %s280, %s282
      %p286 = scmp.eq.s32.totalorder %s31, 0
      %p287 = por %p285, %p286
      %p288 = scmp.ne.s32.totalorder %s280, %s282
      %p289 = scmp.eq.s32.totalorder %s36, 1
      %p290 = por %p288, %p289
      %p291 = scmp.ne.s32.totalorder %s282, %s283
      %p292 = scmp.eq.s32.totalorder %s36, 0
      %p293 = por %p291, %p292
      %p294 = scmp.ne.s32.totalorder %s282, %s283
      %p295 = scmp.eq.s32.totalorder %s37, 1
      %p296 = por %p294, %p295
      %p298 = scmp.ne.s32.totalorder %s283, %s297
      %p299 = scmp.eq.s32.totalorder %s37, 0
      %p300 = por %p298, %p299
      %s302 = sadd.s32 %s301, 1
      %p305 = scmp.eq.s32.totalorder %s31, 1
      %p306 = scmp.ne.s32.totalorder %s301, %s303
      %p307 = scmp.eq.s32.totalorder %s31, 0
      %p308 = por %p306, %p307
      %p309 = scmp.ne.s32.totalorder %s301, %s303
      %p310 = scmp.eq.s32.totalorder %s36, 1
      %p311 = por %p309, %p310
      %p312 = scmp.ne.s32.totalorder %s303, %s304
      %p313 = scmp.eq.s32.totalorder %s36, 0
      %p314 = por %p312, %p313
      %p315 = scmp.ne.s32.totalorder %s303, %s304
      %p316 = scmp.eq.s32.totalorder %s37, 1
      %p317 = por %p315, %p316
      %p319 = scmp.ne.s32.totalorder %s304, %s318
      %p320 = scmp.eq.s32.totalorder %s37, 0
      %p321 = por %p319, %p320
      %s323 = sadd.s32 %s322, 1
      %p326 = scmp.eq.s32.totalorder %s31, 1
      %p327 = scmp.ne.s32.totalorder %s322, %s324
      %p328 = scmp.eq.s32.totalorder %s31, 0
      %p329 = por %p327, %p328
      %p330 = scmp.ne.s32.totalorder %s322, %s324
      %p331 = scmp.eq.s32.totalorder %s36, 1
      %p332 = por %p330, %p331
      %p333 = scmp.ne.s32.totalorder %s324, %s325
      %p334 = scmp.eq.s32.totalorder %s36, 0
      %p335 = por %p333, %p334
      %p336 = scmp.ne.s32.totalorder %s324, %s325
      %p337 = scmp.eq.s32.totalorder %s37, 1
      %p338 = por %p336, %p337
      %p340 = scmp.ne.s32.totalorder %s325, %s339
      %p341 = scmp.eq.s32.totalorder %s37, 0
      %p342 = por %p340, %p341
      %s343 = ssub.s32 %s31, %s38
      %p344 = scmp.eq.s32.totalorder %s343, 0
      %s346 = sadd.s32 %s345, 1
      %s347 = scalar_select %p344, %s345, %s346
      %p350 = pneg %p344
      %p351 = scmp.eq.s32.totalorder %s31, 1
      %p352 = por %p350, %p351
      %p353 = scmp.ne.s32.totalorder %s345, %s348
      %p354 = scmp.eq.s32.totalorder %s31, 0
      %p355 = por %p353, %p354
      %p356 = scmp.ne.s32.totalorder %s345, %s348
      %p357 = scmp.eq.s32.totalorder %s36, 1
      %p358 = por %p356, %p357
      %p359 = scmp.ne.s32.totalorder %s348, %s349
      %p360 = scmp.eq.s32.totalorder %s36, 0
      %p361 = por %p359, %p360
      %p362 = scmp.ne.s32.totalorder %s348, %s349
      %p363 = scmp.eq.s32.totalorder %s37, 1
      %p364 = por %p362, %p363
      %p366 = scmp.ne.s32.totalorder %s349, %s365
      %p367 = scmp.eq.s32.totalorder %s37, 0
      %p368 = por %p366, %p367
      %p369 = scmp.le.s32.totalorder 1, %s31
      %p370 = scmp.lt.s32.totalorder %s31, 3
      %p371 = pnand %p369, %p370
      %p372 = pneg %p371
      // Predicated region
      $region9: #{encoder_forward.1} parent=5 // pred_check
        _
      $region10: #{encoder_forward.1} parent=5 // pred_check_branch
        %374 = sbr.rel (%p371) target = $region12
      $region11: #{encoder_forward.1} parent=5 // pred_region
        %s375 = ssub.s32 %s31, 1
        // Predicated region
        $region13: #{encoder_forward.1} parent=11 // pred_check
          %p376 = pneg %p104
        $region14: #{encoder_forward.1} parent=11 // pred_check_branch
          %378 = sbr.rel (%p376) target = $region16
        $region15: #{encoder_forward.1} parent=11 // pred_region
          _
        $region16: #{encoder_forward.1} parent=11 // pred_fallthru
          _
        // Predicated region
        $region17: #{encoder_forward.1} parent=11 // pred_check
          %p379 = pneg %p125
        $region18: #{encoder_forward.1} parent=11 // pred_check_branch
          %381 = sbr.rel (%p379) target = $region20
        $region19: #{encoder_forward.1} parent=11 // pred_region
          %383 = vsyncadd [#allocation7], 0
          %s384 = sshll.u32 %s3, 4
          %s385 = int_to_ptr.hbm [resolvable:$true] %s384
          %s386 = sshll.u32 [#allocation8], 4
          %s387 = int_to_ptr.vmem [resolvable:$true] %s386
          %392 = dma.hbm_to_vmem [thread:$0]  %s385, 32, %s387, [#allocation7], 16, 16, 1
        $region20: #{encoder_forward.1} parent=11 // pred_fallthru
          _
        // Predicated region
        $region21: #{encoder_forward.1} parent=11 // pred_check
          %p393 = pneg %p146
        $region22: #{encoder_forward.1} parent=11 // pred_check_branch
          %395 = sbr.rel (%p393) target = $region24
        $region23: #{encoder_forward.1} parent=11 // pred_region
          _
        $region24: #{encoder_forward.1} parent=11 // pred_fallthru
          _
        // Predicated region
        $region25: #{encoder_forward.1} parent=11 // pred_check
          %p396 = pneg %p167
        $region26: #{encoder_forward.1} parent=11 // pred_check_branch
          %398 = sbr.rel (%p396) target = $region28
        $region27: #{encoder_forward.1} parent=11 // pred_region
          %400 = vsyncadd [#allocation10], 0
          %s401 = sshll.u32 %s5, 4
          %s402 = int_to_ptr.hbm [resolvable:$true] %s401
          %s403 = sshll.u32 [#allocation9], 4
          %s404 = int_to_ptr.vmem [resolvable:$true] %s403
          %409 = dma.hbm_to_vmem [thread:$0]  %s402, 32, %s404, [#allocation10], 16, 16, 1
        $region28: #{encoder_forward.1} parent=11 // pred_fallthru
          _
        // Predicated region
        $region29: #{encoder_forward.1} parent=11 // pred_check
          %p410 = pneg %p188
        $region30: #{encoder_forward.1} parent=11 // pred_check_branch
          %412 = sbr.rel (%p410) target = $region32
        $region31: #{encoder_forward.1} parent=11 // pred_region
          _
        $region32: #{encoder_forward.1} parent=11 // pred_fallthru
          _
        // Predicated region
        $region33: #{encoder_forward.1} parent=11 // pred_check
          %p413 = pneg %p209
        $region34: #{encoder_forward.1} parent=11 // pred_check_branch
          %415 = sbr.rel (%p413) target = $region36
        $region35: #{encoder_forward.1} parent=11 // pred_region
          %417 = vsyncadd [#allocation10], 0
          %s418 = sshll.u32 %s7, 4
          %s419 = int_to_ptr.hbm [resolvable:$true] %s418
          %s420 = sshll.u32 [#allocation11], 4
          %s421 = int_to_ptr.vmem [resolvable:$true] %s420
          %426 = dma.hbm_to_vmem [thread:$0]  %s419, 32, %s421, [#allocation10], 16, 16, 1
        $region36: #{encoder_forward.1} parent=11 // pred_fallthru
          _
        // Predicated region
        $region37: #{encoder_forward.1} parent=11 // pred_check
          %p427 = pneg %p230
        $region38: #{encoder_forward.1} parent=11 // pred_check_branch
          %429 = sbr.rel (%p427) target = $region40
        $region39: #{encoder_forward.1} parent=11 // pred_region
          _
        $region40: #{encoder_forward.1} parent=11 // pred_fallthru
          _
        // Predicated region
        $region41: #{encoder_forward.1} parent=11 // pred_check
          %p430 = pneg %p251
        $region42: #{encoder_forward.1} parent=11 // pred_check_branch
          %432 = sbr.rel (%p430) target = $region44
        $region43: #{encoder_forward.1} parent=11 // pred_region
          %434 = vsyncadd [#allocation13], 0
          %s435 = sshll.u32 %s9, 4
          %s436 = int_to_ptr.hbm [resolvable:$true] %s435
          %s437 = sshll.u32 [#allocation12], 4
          %s438 = int_to_ptr.vmem [resolvable:$true] %s437
          %443 = dma.hbm_to_vmem [thread:$0]  %s436, 32, %s438, [#allocation13], 16, 16, 1
        $region44: #{encoder_forward.1} parent=11 // pred_fallthru
          _
        // Predicated region
        $region45: #{encoder_forward.1} parent=11 // pred_check
          %p444 = pneg %p272
        $region46: #{encoder_forward.1} parent=11 // pred_check_branch
          %446 = sbr.rel (%p444) target = $region48
        $region47: #{encoder_forward.1} parent=11 // pred_region
          _
        $region48: #{encoder_forward.1} parent=11 // pred_fallthru
          _
        // Predicated region
        $region49: #{encoder_forward.1} parent=11 // pred_check
          %p447 = pneg %p293
        $region50: #{encoder_forward.1} parent=11 // pred_check_branch
          %449 = sbr.rel (%p447) target = $region52
        $region51: #{encoder_forward.1} parent=11 // pred_region
          _
        $region52: #{encoder_forward.1} parent=11 // pred_fallthru
          _
        // Predicated region
        $region53: #{encoder_forward.1} parent=11 // pred_check
          %p450 = pneg %p314
        $region54: #{encoder_forward.1} parent=11 // pred_check_branch
          %452 = sbr.rel (%p450) target = $region56
        $region55: #{encoder_forward.1} parent=11 // pred_region
          _
        $region56: #{encoder_forward.1} parent=11 // pred_fallthru
          _
        // Predicated region
        $region57: #{encoder_forward.1} parent=11 // pred_check
          %p453 = pneg %p335
        $region58: #{encoder_forward.1} parent=11 // pred_check_branch
          %455 = sbr.rel (%p453) target = $region60
        $region59: #{encoder_forward.1} parent=11 // pred_region
          _
        $region60: #{encoder_forward.1} parent=11 // pred_fallthru
          _
      $region12: #{encoder_forward.1} parent=5 // pred_fallthru
        _
      %p456 = scmp.lt.s32.totalorder %s31, 2
      // Predicated region
      $region61: #{encoder_forward.1} parent=5 // pred_check
        %p457 = pneg %p456
      $region62: #{encoder_forward.1} parent=5 // pred_check_branch
        %459 = sbr.rel (%p457) target = $region64
      $region63: #{encoder_forward.1} parent=5 // pred_region
        // Predicated region
        $region65: #{encoder_forward.1} parent=63 // pred_check
          %p460 = pneg %p51
        $region66: #{encoder_forward.1} parent=63 // pred_check_branch
          %462 = sbr.rel (%p460) target = $region68
        $region67: #{encoder_forward.1} parent=63 // pred_region
          %s463 = sand.u32 %s41, 1
          %s464 = scalar_lea.sflag [#allocation4], %s463
          %s465 = sand.u32 %s41, 1
          %s466 = smul.addr %s465, 8
          %s467 = scalar_lea.vmem [#allocation3], %s466
          %469 = vsyncadd %s464, 0
          %s470 = smul.addr %s31, 8
          %s471 = scalar_lea.hbm %s0, %s470
          %s473 = sshll.u32 %s471, 4
          %s474 = int_to_ptr.hbm [resolvable:$true] %s473
          %s475 = sshll.u32 %s467, 4
          %s476 = int_to_ptr.vmem [resolvable:$true] %s475
          %478 = dma.hbm_to_vmem [thread:$0]  %s474, 128, %s476, %s464
        $region68: #{encoder_forward.1} parent=63 // pred_fallthru
          _
        // Predicated region
        $region69: #{encoder_forward.1} parent=63 // pred_check
          %p479 = pneg %p77
        $region70: #{encoder_forward.1} parent=63 // pred_check_branch
          %481 = sbr.rel (%p479) target = $region72
        $region71: #{encoder_forward.1} parent=63 // pred_region
          %s482 = sand.u32 %s31, 1
          %s483 = scalar_lea.sflag [#allocation7], %s482
          %s484 = sand.u32 %s67, 1
          %s485 = scalar_lea.vmem [#allocation6], %s484
          %487 = vsyncadd %s483, 0
          %s488 = scalar_lea.hbm %s1, %s31
          %s490 = sshll.u32 %s488, 4
          %s491 = int_to_ptr.hbm [resolvable:$true] %s490
          %s492 = sshll.u32 %s485, 4
          %s493 = int_to_ptr.vmem [resolvable:$true] %s492
          %495 = dma.hbm_to_vmem [thread:$0]  %s491, 16, %s493, %s483
        $region72: #{encoder_forward.1} parent=63 // pred_fallthru
          _
      $region64: #{encoder_forward.1} parent=5 // pred_fallthru
        _
      %p496 = scmp.le.s32.totalorder 1, %s31
      %p497 = scmp.lt.s32.totalorder %s31, 3
      %p498 = pnand %p496, %p497
      %p499 = pneg %p498
      // Predicated region
      $region73: #{encoder_forward.1} parent=5 // pred_check
        _
      $region74: #{encoder_forward.1} parent=5 // pred_check_branch
        %501 = sbr.rel (%p498) target = $region76
      $region75: #{encoder_forward.1} parent=5 // pred_region
        %s502 = ssub.s32 %s31, 1
        %s503 = sand.u32 %s44, 1
        %s504 = scalar_lea.sflag [#allocation4], %s503
        %s505 = sand.u32 %s44, 1
        %s506 = smul.addr %s505, 8
        %s507 = scalar_lea.vmem [#allocation3], %s506
        // Predicated region
        $region77: #{encoder_forward.1} parent=75 // pred_check
          %p508 = pneg %p57
        $region78: #{encoder_forward.1} parent=75 // pred_check_branch
          %510 = sbr.rel (%p508) target = $region80
        $region79: #{encoder_forward.1} parent=75 // pred_region
          %512 = dma.done %s504, 128
        $region80: #{encoder_forward.1} parent=75 // pred_fallthru
          _
        %s513 = sand.u32 %s36, 1
        %s514 = scalar_lea.sflag [#allocation7], %s513
        %s515 = sand.u32 %s70, 1
        %s516 = scalar_lea.vmem [#allocation6], %s515
        // Predicated region
        $region81: #{encoder_forward.1} parent=75 // pred_check
          %p517 = pneg %p83
        $region82: #{encoder_forward.1} parent=75 // pred_check_branch
          %519 = sbr.rel (%p517) target = $region84
        $region83: #{encoder_forward.1} parent=75 // pred_region
          %521 = dma.done %s514, 16
        $region84: #{encoder_forward.1} parent=75 // pred_fallthru
          _
        // Predicated region
        $region85: #{encoder_forward.1} parent=75 // pred_check
          %p522 = pneg %p125
        $region86: #{encoder_forward.1} parent=75 // pred_check_branch
          %524 = sbr.rel (%p522) target = $region88
        $region87: #{encoder_forward.1} parent=75 // pred_region
          %526 = dma.done [#allocation7], 32
        $region88: #{encoder_forward.1} parent=75 // pred_fallthru
          _
        // Predicated region
        $region89: #{encoder_forward.1} parent=75 // pred_check
          %p527 = pneg %p167
        $region90: #{encoder_forward.1} parent=75 // pred_check_branch
          %529 = sbr.rel (%p527) target = $region92
        $region91: #{encoder_forward.1} parent=75 // pred_region
          %531 = dma.done [#allocation10], 32
        $region92: #{encoder_forward.1} parent=75 // pred_fallthru
          _
        // Predicated region
        $region93: #{encoder_forward.1} parent=75 // pred_check
          %p532 = pneg %p209
        $region94: #{encoder_forward.1} parent=75 // pred_check_branch
          %534 = sbr.rel (%p532) target = $region96
        $region95: #{encoder_forward.1} parent=75 // pred_region
          %536 = dma.done [#allocation10], 32
        $region96: #{encoder_forward.1} parent=75 // pred_fallthru
          _
        // Predicated region
        $region97: #{encoder_forward.1} parent=75 // pred_check
          %p537 = pneg %p251
        $region98: #{encoder_forward.1} parent=75 // pred_check_branch
          %539 = sbr.rel (%p537) target = $region100
        $region99: #{encoder_forward.1} parent=75 // pred_region
          %541 = dma.done [#allocation13], 32
        $region100: #{encoder_forward.1} parent=75 // pred_fallthru
          _
        %s542 = sand.u32 %s44, 1
        %s543 = scalar_lea.sflag [#allocation4], %s542
        %s544 = sand.u32 %s44, 1
        %s545 = smul.addr %s544, 8
        %s546 = scalar_lea.vmem [#allocation3], %s545
        %p547 = pneg %p57
        %p548 = pneg %p54
        %s549 = sand.u32 %s36, 1
        %s550 = scalar_lea.sflag [#allocation7], %s549
        %s551 = sand.u32 %s70, 1
        %s552 = scalar_lea.vmem [#allocation6], %s551
        %p553 = pneg %p83
        %p554 = pneg %p80
        %p555 = pneg %p104
        %p556 = pneg %p101
        %p557 = pneg %p125
        %p558 = pneg %p122
        %p559 = pneg %p146
        %p560 = pneg %p143
        %p561 = pneg %p167
        %p562 = pneg %p164
        %p563 = pneg %p188
        %p564 = pneg %p185
        %p565 = pneg %p209
        %p566 = pneg %p206
        %p567 = pneg %p230
        %p568 = pneg %p227
        %p569 = pneg %p251
        %p570 = pneg %p248
        %p571 = pneg %p272
        %p572 = pneg %p269
        %p573 = pneg %p293
        %p574 = pneg %p290
        %p575 = pneg %p314
        %p576 = pneg %p311
        %p577 = pneg %p335
        %p578 = pneg %p332
        %p579 = pneg %p361
        %p580 = pneg %p358
        %s581 = sand.u32 %s348, 1
        %s582 = scalar_lea.sflag [#allocation5], %s581
        %s583 = sand.u32 %s348, 1
        %s584 = smul.addr %s583, 8
        %s585 = scalar_lea.vmem [#allocation14], %s584
        %v586 = vld [vmem:[%s507] sm:$0xff]
        %v587 = vld [vmem:[%s516] sm:$0x1]
        %vm588 = vcmp.ne.f32.partialorder %v587, 0.0
        %v589 = vld [vmem:[%s10] sm:$0x1]
        %v590 = vld [vmem:[%s11] sm:$0x1]
        %vm591 = vcmask 261120
        %v592 = vsel %vm591, %v586, 0.0
        %593 = vadd.xlane.f32.xlu0 %v592
        %v594 = vpop.xlane.xlu0 %593
        %v595 = vrcp.pop 32.0
        %v596 = vmul.f32 32.0, %v595
        %v597 = vsub.f32 1.0, %v596
        %v598 = vmul.f32 %v595, %v597
        %v599 = vadd.f32 %v595, %v598
        %vm600 = vweird.f32 %v595
        %v601 = vsel %vm600, %v595, %v599
        %v602 = vmul.f32 %v594, %v601
        %v603 = vsub.f32 %v586, %v602
        %v604 = vmul.f32 %v603, %v603
        %v605 = vsel %vm591, %v604, 0.0
        %606 = vadd.xlane.f32.xlu0 %v605
        %v607 = vpop.xlane.xlu0 %606
        %v608 = vrcp.pop 31.0
        %v609 = vmul.f32 31.0, %v608
        %v610 = vsub.f32 1.0, %v609
        %v611 = vmul.f32 %v608, %v610
        %v612 = vadd.f32 %v608, %v611
        %vm613 = vweird.f32 %v608
        %v614 = vsel %vm613, %v608, %v612
        %v615 = vmul.f32 %v607, %v614
        %v617 = vperm.slane %v589, 0
        %v619 = vmul.f32 %v617, %v603
        %v620 = vrsqrt.pop %v615
        %v621 = vmul.f32 %v620, %v615
        %v622 = vmul.f32 %v621, %v620
        %v623 = vmul.f32 0.5, %v622
        %v624 = vsub.f32 1.5, %v623
        %v625 = vmul.f32 %v620, %v624
        %v626 = vmul.f32 %v615, %v625
        %vm627 = vcmp.eq.f32.partialorder %v615, inf
        %v628 = vsel %vm627, %v615, %v626
        %vm629 = vcmp.eq.f32.partialorder %v615, 0.0
        %v630 = vand.u32 %v615, 2147483648
        %v631 = vsel %vm629, %v630, %v628
        %v632 = vadd.f32 %v631, 1e-06
        %v633 = vrcp.pop %v632
        %v634 = vmul.f32 %v632, %v633
        %v635 = vsub.f32 1.0, %v634
        %v636 = vmul.f32 %v633, %v635
        %v637 = vadd.f32 %v633, %v636
        %vm638 = vweird.f32 %v632
        %vm639 = vweird.f32 %v633
        %vm640 = vmor %vm638, %vm639
        %v641 = vsel %vm640, %v633, %v637
        %v642 = vand.u32 2147483647, %v632
        %vm643 = vcmp.eq.f32.partialorder %v642, 8.507059e+37
        %v644 = vand.u32 %v632, 2147483648
        %v645 = vor.u32 1.1754944e-38, %v644
        %v646 = vsel %vm643, %v645, %v641
        %v647 = vmul.f32 %v619, %v646
        %v649 = vperm.slane %v590, 0
        %v651 = vadd.f32 %v647, %v649
        %v652 = vld [vmem:[%s2] sm:$0xff]
        %v653 = vld [vmem:[%s2 + $0x8] sm:$0xff]
        %v654 = vld [vmem:[%s2 + $0x10] sm:$0xff]
        %v655 = vld [vmem:[%s2 + $0x18] sm:$0xff]
        %v656 = vld [vmem:[#allocation8] sm:$0x1]
        %v658 = vperm.slane %v656, 0
        %v661 = vsel %vm591, %v651, 0
        %663 = vmatpush.msra.mxu0 0.0
        %664 = vmatpush.msra.mxu0 0.0
        %665 = vmatpush.msra.mxu0 0.0
        %666 = vmatpush.msra.mxu0 0.0
        %667 = vmatpush.msra.mxu0 0.0
        %668 = vmatpush.msra.mxu0 0.0
        %669 = vmatpush.msra.mxu0 0.0
        %670 = vmatpush.msra.mxu0 0.0
        %671 = vmatpush.msra.mxu0 0.0
        %672 = vmatpush.msra.mxu0 0.0
        %673 = vmatpush.msra.mxu0 0.0
        %674 = vmatpush.msra.mxu0 0.0
        %675 = vmatpush.msra.mxu0 %v655
        %676 = vmatpush.msra.mxu0 %v654
        %677 = vmatpush.msra.mxu0 %v653
        %678 = vmatpush.msra.mxu0 %v652
        %679 = vmatmul.f32.gmra.mxu0 %v661
        %v680 = vpop.f32.mrf.mxu0
        %v681 = vadd.f32 %v658, %v680
        %682 = vdwg.mxu0
        %684 = vrot.lane.b32.xlu0 %v681, 96
        %v685 = vpop.permute.xlu0 %684
        %vm686 = vcmask 64512
        %v687 = vsel %vm686, %v681, 0
        %v689 = vsel %vm686, %v685, 0
        %691 = vmatpush.xpose.msra.mxu0 0.0
        %692 = vmatpush.xpose.msra.mxu0 0.0
        %693 = vmatpush.xpose.msra.mxu0 0.0
        %694 = vmatpush.xpose.msra.mxu0 0.0
        %695 = vmatpush.xpose.msra.mxu0 0.0
        %696 = vmatpush.xpose.msra.mxu0 0.0
        %697 = vmatpush.xpose.msra.mxu0 0.0
        %698 = vmatpush.xpose.msra.mxu0 0.0
        %699 = vmatpush.xpose.msra.mxu0 0.0
        %700 = vmatpush.xpose.msra.mxu0 0.0
        %701 = vmatpush.xpose.msra.mxu0 0.0
        %702 = vmatpush.xpose.msra.mxu0 0.0
        %703 = vmatpush.xpose.msra.mxu0 0.0
        %704 = vmatpush.xpose.msra.mxu0 0.0
        %705 = vmatpush.xpose.msra.mxu0 0.0
        %706 = vmatpush.xpose.msra.mxu0 %v689
        %707 = vmatmul.f32.gmra.mxu0 %v687
        %v708 = vpop.f32.mrf.mxu0
        %v709 = vadd.f32 0.0, %v708
        %710 = vdwg.mxu0
        %v711 = vmul.f32 %v709, 0.35355338
        %v712 = vsel %vm588, 1, 0
        %v713 = vperm.slane %v712, 0
        %vm714 = vcmp.eq.s32.totalorder %v713, 1
        %v715 = vsel %vm714, %v711, -1e+09
        %v716 = vsel %vm686, %v715, -inf
        %717 = vmax.xlane.f32.xlu0 %v716
        %v718 = vpop.xlane.xlu0 %717
        %v719 = vsub.f32 %v715, %v718
        %v720 = vmul.f32 %v719, 1.442695
        %v721 = vpow.pop %v720
        %v722 = vsel %vm686, %v721, 0.0
        %723 = vadd.xlane.f32.xlu0 %v722
        %v724 = vpop.xlane.xlu0 %723
        %v725 = vrcp.pop %v724
        %v726 = vmul.f32 %v724, %v725
        %v727 = vsub.f32 1.0, %v726
        %v728 = vmul.f32 %v725, %v727
        %v729 = vadd.f32 %v725, %v728
        %vm730 = vweird.f32 %v724
        %vm731 = vweird.f32 %v725
        %vm732 = vmor %vm730, %vm731
        %v733 = vsel %vm732, %v725, %v729
        %v734 = vand.u32 2147483647, %v724
        %vm735 = vcmp.eq.f32.partialorder %v734, 8.507059e+37
        %v736 = vand.u32 %v724, 2147483648
        %v737 = vor.u32 1.1754944e-38, %v736
        %v738 = vsel %vm735, %v737, %v733
        %v739 = vmul.f32 %v721, %v738
        %740 = vrot.lane.b32.xlu0 %v681, 64
        %v741 = vpop.permute.xlu0 %740
        %v744 = vsel %vm686, %v739, 0
        %746 = vmatpush.msra.mxu0 0.0
        %747 = vmatpush.msra.mxu0 0.0
        %748 = vmatpush.msra.mxu0 0.0
        %749 = vmatpush.msra.mxu0 0.0
        %750 = vmatpush.msra.mxu0 0.0
        %751 = vmatpush.msra.mxu0 0.0
        %752 = vmatpush.msra.mxu0 0.0
        %753 = vmatpush.msra.mxu0 0.0
        %754 = vmatpush.msra.mxu0 0.0
        %755 = vmatpush.msra.mxu0 0.0
        %756 = vmatpush.msra.mxu0 0.0
        %757 = vmatpush.msra.mxu0 0.0
        %758 = vmatpush.msra.mxu0 0.0
        %759 = vmatpush.msra.mxu0 0.0
        %760 = vmatpush.msra.mxu0 0.0
        %761 = vmatpush.msra.mxu0 %v741
        %762 = vmatmul.f32.gmra.mxu0 %v744
        %v763 = vpop.f32.mrf.mxu0
        %v764 = vadd.f32 0.0, %v763
        %765 = vdwg.mxu0
        %766 = vst.msk [vmem:[#allocation2] sm:$0xff] %vm686, %v764
        %767 = vrot.lane.b32.xlu0 %v681, 120
        %v768 = vpop.permute.xlu0 %767
        %769 = vrot.lane.b32.xlu0 %v681, 88
        %v770 = vpop.permute.xlu0 %769
        %v771 = vsel %vm686, %v768, 0
        %v773 = vsel %vm686, %v770, 0
        %775 = vmatpush.xpose.msra.mxu0 0.0
        %776 = vmatpush.xpose.msra.mxu0 0.0
        %777 = vmatpush.xpose.msra.mxu0 0.0
        %778 = vmatpush.xpose.msra.mxu0 0.0
        %779 = vmatpush.xpose.msra.mxu0 0.0
        %780 = vmatpush.xpose.msra.mxu0 0.0
        %781 = vmatpush.xpose.msra.mxu0 0.0
        %782 = vmatpush.xpose.msra.mxu0 0.0
        %783 = vmatpush.xpose.msra.mxu0 0.0
        %784 = vmatpush.xpose.msra.mxu0 0.0
        %785 = vmatpush.xpose.msra.mxu0 0.0
        %786 = vmatpush.xpose.msra.mxu0 0.0
        %787 = vmatpush.xpose.msra.mxu0 0.0
        %788 = vmatpush.xpose.msra.mxu0 0.0
        %789 = vmatpush.xpose.msra.mxu0 0.0
        %790 = vmatpush.xpose.msra.mxu0 %v773
        %791 = vmatmul.f32.gmra.mxu0 %v771
        %v792 = vpop.f32.mrf.mxu0
        %v793 = vadd.f32 0.0, %v792
        %794 = vdwg.mxu0
        %v795 = vmul.f32 %v793, 0.35355338
        %v796 = vsel %vm714, %v795, -1e+09
        %v797 = vsel %vm686, %v796, -inf
        %798 = vmax.xlane.f32.xlu0 %v797
        %v799 = vpop.xlane.xlu0 %798
        %v800 = vsub.f32 %v796, %v799
        %v801 = vmul.f32 %v800, 1.442695
        %v802 = vpow.pop %v801
        %v803 = vsel %vm686, %v802, 0.0
        %804 = vadd.xlane.f32.xlu0 %v803
        %v805 = vpop.xlane.xlu0 %804
        %v806 = vrcp.pop %v805
        %v807 = vmul.f32 %v805, %v806
        %v808 = vsub.f32 1.0, %v807
        %v809 = vmul.f32 %v806, %v808
        %v810 = vadd.f32 %v806, %v809
        %vm811 = vweird.f32 %v805
        %vm812 = vweird.f32 %v806
        %vm813 = vmor %vm811, %vm812
        %v814 = vsel %vm813, %v806, %v810
        %v815 = vand.u32 2147483647, %v805
        %vm816 = vcmp.eq.f32.partialorder %v815, 8.507059e+37
        %v817 = vand.u32 %v805, 2147483648
        %v818 = vor.u32 1.1754944e-38, %v817
        %v819 = vsel %vm816, %v818, %v814
        %v820 = vmul.f32 %v802, %v819
        %821 = vrot.lane.b32.xlu0 %v681, 56
        %v822 = vpop.permute.xlu0 %821
        %v825 = vsel %vm686, %v820, 0
        %827 = vmatpush.msra.mxu0 0.0
        %828 = vmatpush.msra.mxu0 0.0
        %829 = vmatpush.msra.mxu0 0.0
        %830 = vmatpush.msra.mxu0 0.0
        %831 = vmatpush.msra.mxu0 0.0
        %832 = vmatpush.msra.mxu0 0.0
        %833 = vmatpush.msra.mxu0 0.0
        %834 = vmatpush.msra.mxu0 0.0
        %835 = vmatpush.msra.mxu0 0.0
        %836 = vmatpush.msra.mxu0 0.0
        %837 = vmatpush.msra.mxu0 0.0
        %838 = vmatpush.msra.mxu0 0.0
        %839 = vmatpush.msra.mxu0 0.0
        %840 = vmatpush.msra.mxu0 0.0
        %841 = vmatpush.msra.mxu0 0.0
        %842 = vmatpush.msra.mxu0 %v822
        %843 = vmatmul.f32.gmra.mxu0 %v825
        %v844 = vpop.f32.mrf.mxu0
        %v845 = vadd.f32 0.0, %v844
        %846 = vdwg.mxu0
        %848 = vrot.lane.b32.xlu0 %v845, 8
        %v849 = vpop.permute.xlu0 %848
        %vm851 = vcmask 130112
        %852 = vst.msk [vmem:[#allocation2] sm:$0xff] %vm851, %v849
        %853 = vrot.lane.b32.xlu0 %v681, 112
        %v854 = vpop.permute.xlu0 %853
        %855 = vrot.lane.b32.xlu0 %v681, 80
        %v856 = vpop.permute.xlu0 %855
        %v857 = vsel %vm686, %v854, 0
        %v859 = vsel %vm686, %v856, 0
        %861 = vmatpush.xpose.msra.mxu0 0.0
        %862 = vmatpush.xpose.msra.mxu0 0.0
        %863 = vmatpush.xpose.msra.mxu0 0.0
        %864 = vmatpush.xpose.msra.mxu0 0.0
        %865 = vmatpush.xpose.msra.mxu0 0.0
        %866 = vmatpush.xpose.msra.mxu0 0.0
        %867 = vmatpush.xpose.msra.mxu0 0.0
        %868 = vmatpush.xpose.msra.mxu0 0.0
        %869 = vmatpush.xpose.msra.mxu0 0.0
        %870 = vmatpush.xpose.msra.mxu0 0.0
        %871 = vmatpush.xpose.msra.mxu0 0.0
        %872 = vmatpush.xpose.msra.mxu0 0.0
        %873 = vmatpush.xpose.msra.mxu0 0.0
        %874 = vmatpush.xpose.msra.mxu0 0.0
        %875 = vmatpush.xpose.msra.mxu0 0.0
        %876 = vmatpush.xpose.msra.mxu0 %v859
        %877 = vmatmul.f32.gmra.mxu0 %v857
        %v878 = vpop.f32.mrf.mxu0
        %v879 = vadd.f32 0.0, %v878
        %880 = vdwg.mxu0
        %v881 = vmul.f32 %v879, 0.35355338
        %v882 = vsel %vm714, %v881, -1e+09
        %v883 = vsel %vm686, %v882, -inf
        %884 = vmax.xlane.f32.xlu0 %v883
        %v885 = vpop.xlane.xlu0 %884
        %v886 = vsub.f32 %v882, %v885
        %v887 = vmul.f32 %v886, 1.442695
        %v888 = vpow.pop %v887
        %v889 = vsel %vm686, %v888, 0.0
        %890 = vadd.xlane.f32.xlu0 %v889
        %v891 = vpop.xlane.xlu0 %890
        %v892 = vrcp.pop %v891
        %v893 = vmul.f32 %v891, %v892
        %v894 = vsub.f32 1.0, %v893
        %v895 = vmul.f32 %v892, %v894
        %v896 = vadd.f32 %v892, %v895
        %vm897 = vweird.f32 %v891
        %vm898 = vweird.f32 %v892
        %vm899 = vmor %vm897, %vm898
        %v900 = vsel %vm899, %v892, %v896
        %v901 = vand.u32 2147483647, %v891
        %vm902 = vcmp.eq.f32.partialorder %v901, 8.507059e+37
        %v903 = vand.u32 %v891, 2147483648
        %v904 = vor.u32 1.1754944e-38, %v903
        %v905 = vsel %vm902, %v904, %v900
        %v906 = vmul.f32 %v888, %v905
        %907 = vrot.lane.b32.xlu0 %v681, 48
        %v908 = vpop.permute.xlu0 %907
        %v911 = vsel %vm686, %v906, 0
        %913 = vmatpush.msra.mxu0 0.0
        %914 = vmatpush.msra.mxu0 0.0
        %915 = vmatpush.msra.mxu0 0.0
        %916 = vmatpush.msra.mxu0 0.0
        %917 = vmatpush.msra.mxu0 0.0
        %918 = vmatpush.msra.mxu0 0.0
        %919 = vmatpush.msra.mxu0 0.0
        %920 = vmatpush.msra.mxu0 0.0
        %921 = vmatpush.msra.mxu0 0.0
        %922 = vmatpush.msra.mxu0 0.0
        %923 = vmatpush.msra.mxu0 0.0
        %924 = vmatpush.msra.mxu0 0.0
        %925 = vmatpush.msra.mxu0 0.0
        %926 = vmatpush.msra.mxu0 0.0
        %927 = vmatpush.msra.mxu0 0.0
        %928 = vmatpush.msra.mxu0 %v908
        %929 = vmatmul.f32.gmra.mxu0 %v911
        %v930 = vpop.f32.mrf.mxu0
        %v931 = vadd.f32 0.0, %v930
        %932 = vdwg.mxu0
        %934 = vrot.lane.b32.xlu0 %v931, 16
        %v935 = vpop.permute.xlu0 %934
        %vm937 = vcmask 195712
        %938 = vst.msk [vmem:[#allocation2] sm:$0xff] %vm937, %v935
        %939 = vrot.lane.b32.xlu0 %v681, 104
        %v940 = vpop.permute.xlu0 %939
        %941 = vrot.lane.b32.xlu0 %v681, 72
        %v942 = vpop.permute.xlu0 %941
        %v943 = vsel %vm686, %v940, 0
        %v945 = vsel %vm686, %v942, 0
        %947 = vmatpush.xpose.msra.mxu0 0.0
        %948 = vmatpush.xpose.msra.mxu0 0.0
        %949 = vmatpush.xpose.msra.mxu0 0.0
        %950 = vmatpush.xpose.msra.mxu0 0.0
        %951 = vmatpush.xpose.msra.mxu0 0.0
        %952 = vmatpush.xpose.msra.mxu0 0.0
        %953 = vmatpush.xpose.msra.mxu0 0.0
        %954 = vmatpush.xpose.msra.mxu0 0.0
        %955 = vmatpush.xpose.msra.mxu0 0.0
        %956 = vmatpush.xpose.msra.mxu0 0.0
        %957 = vmatpush.xpose.msra.mxu0 0.0
        %958 = vmatpush.xpose.msra.mxu0 0.0
        %959 = vmatpush.xpose.msra.mxu0 0.0
        %960 = vmatpush.xpose.msra.mxu0 0.0
        %961 = vmatpush.xpose.msra.mxu0 0.0
        %962 = vmatpush.xpose.msra.mxu0 %v945
        %963 = vmatmul.f32.gmra.mxu0 %v943
        %v964 = vpop.f32.mrf.mxu0
        %v965 = vadd.f32 0.0, %v964
        %966 = vdwg.mxu0
        %v967 = vmul.f32 %v965, 0.35355338
        %v968 = vsel %vm714, %v967, -1e+09
        %v969 = vsel %vm686, %v968, -inf
        %970 = vmax.xlane.f32.xlu0 %v969
        %v971 = vpop.xlane.xlu0 %970
        %v972 = vsub.f32 %v968, %v971
        %v973 = vmul.f32 %v972, 1.442695
        %v974 = vpow.pop %v973
        %v975 = vsel %vm686, %v974, 0.0
        %976 = vadd.xlane.f32.xlu0 %v975
        %v977 = vpop.xlane.xlu0 %976
        %v978 = vrcp.pop %v977
        %v979 = vmul.f32 %v977, %v978
        %v980 = vsub.f32 1.0, %v979
        %v981 = vmul.f32 %v978, %v980
        %v982 = vadd.f32 %v978, %v981
        %vm983 = vweird.f32 %v977
        %vm984 = vweird.f32 %v978
        %vm985 = vmor %vm983, %vm984
        %v986 = vsel %vm985, %v978, %v982
        %v987 = vand.u32 2147483647, %v977
        %vm988 = vcmp.eq.f32.partialorder %v987, 8.507059e+37
        %v989 = vand.u32 %v977, 2147483648
        %v990 = vor.u32 1.1754944e-38, %v989
        %v991 = vsel %vm988, %v990, %v986
        %v992 = vmul.f32 %v974, %v991
        %993 = vrot.lane.b32.xlu0 %v681, 40
        %v994 = vpop.permute.xlu0 %993
        %v997 = vsel %vm686, %v992, 0
        %999 = vmatpush.msra.mxu0 0.0
        %1000 = vmatpush.msra.mxu0 0.0
        %1001 = vmatpush.msra.mxu0 0.0
        %1002 = vmatpush.msra.mxu0 0.0
        %1003 = vmatpush.msra.mxu0 0.0
        %1004 = vmatpush.msra.mxu0 0.0
        %1005 = vmatpush.msra.mxu0 0.0
        %1006 = vmatpush.msra.mxu0 0.0
        %1007 = vmatpush.msra.mxu0 0.0
        %1008 = vmatpush.msra.mxu0 0.0
        %1009 = vmatpush.msra.mxu0 0.0
        %1010 = vmatpush.msra.mxu0 0.0
        %1011 = vmatpush.msra.mxu0 0.0
        %1012 = vmatpush.msra.mxu0 0.0
        %1013 = vmatpush.msra.mxu0 0.0
        %1014 = vmatpush.msra.mxu0 %v994
        %1015 = vmatmul.f32.gmra.mxu0 %v997
        %v1016 = vpop.f32.mrf.mxu0
        %v1017 = vadd.f32 0.0, %v1016
        %1018 = vdwg.mxu0
        %1020 = vrot.lane.b32.xlu0 %v1017, 24
        %v1021 = vpop.permute.xlu0 %1020
        %vm1023 = vcmask 261312
        %1024 = vst.msk [vmem:[#allocation2] sm:$0xff] %vm1023, %v1021
        %v1025 = vld [vmem:[#allocation2] sm:$0xff]
        %v1026 = vld [vmem:[%s4] sm:$0xff]
        %v1027 = vld [vmem:[%s4 + $0x8] sm:$0xff]
        %v1028 = vld [vmem:[%s4 + $0x10] sm:$0xff]
        %v1029 = vld [vmem:[%s4 + $0x18] sm:$0xff]
        %v1030 = vld [vmem:[#allocation9] sm:$0x1]
        %v1032 = vperm.slane %v1030, 0
        %v1035 = vsel %vm591, %v1025, 0
        %1037 = vmatpush.msra.mxu0 0.0
        %1038 = vmatpush.msra.mxu0 0.0
        %1039 = vmatpush.msra.mxu0 0.0
        %1040 = vmatpush.msra.mxu0 0.0
        %1041 = vmatpush.msra.mxu0 0.0
        %1042 = vmatpush.msra.mxu0 0.0
        %1043 = vmatpush.msra.mxu0 0.0
        %1044 = vmatpush.msra.mxu0 0.0
        %1045 = vmatpush.msra.mxu0 0.0
        %1046 = vmatpush.msra.mxu0 0.0
        %1047 = vmatpush.msra.mxu0 0.0
        %1048 = vmatpush.msra.mxu0 0.0
        %1049 = vmatpush.msra.mxu0 %v1029
        %1050 = vmatpush.msra.mxu0 %v1028
        %1051 = vmatpush.msra.mxu0 %v1027
        %1052 = vmatpush.msra.mxu0 %v1026
        %1053 = vmatmul.f32.gmra.mxu0 %v1035
        %v1054 = vpop.f32.mrf.mxu0
        %v1055 = vadd.f32 %v1032, %v1054
        %1056 = vdwg.mxu0
        %v1057 = vadd.f32 %v586, %v1055
        %s1058 = scalar_lea.vmem %s10, 1
        %v1059 = vld [vmem:[%s1058] sm:$0x1]
        %s1060 = scalar_lea.vmem %s11, 1
        %v1061 = vld [vmem:[%s1060] sm:$0x1]
        %v1062 = vsel %vm591, %v1057, 0.0
        %1063 = vadd.xlane.f32.xlu0 %v1062
        %v1064 = vpop.xlane.xlu0 %1063
        %v1065 = vmul.f32 %v1064, %v601
        %v1066 = vsub.f32 %v1057, %v1065
        %v1067 = vmul.f32 %v1066, %v1066
        %v1068 = vsel %vm591, %v1067, 0.0
        %1069 = vadd.xlane.f32.xlu0 %v1068
        %v1070 = vpop.xlane.xlu0 %1069
        %v1071 = vmul.f32 %v1070, %v614
        %v1073 = vperm.slane %v1059, 0
        %v1075 = vmul.f32 %v1073, %v1066
        %v1076 = vrsqrt.pop %v1071
        %v1077 = vmul.f32 %v1076, %v1071
        %v1078 = vmul.f32 %v1077, %v1076
        %v1079 = vmul.f32 0.5, %v1078
        %v1080 = vsub.f32 1.5, %v1079
        %v1081 = vmul.f32 %v1076, %v1080
        %v1082 = vmul.f32 %v1071, %v1081
        %vm1083 = vcmp.eq.f32.partialorder %v1071, inf
        %v1084 = vsel %vm1083, %v1071, %v1082
        %vm1085 = vcmp.eq.f32.partialorder %v1071, 0.0
        %v1086 = vand.u32 %v1071, 2147483648
        %v1087 = vsel %vm1085, %v1086, %v1084
        %v1088 = vadd.f32 %v1087, 1e-06
        %v1089 = vrcp.pop %v1088
        %v1090 = vmul.f32 %v1088, %v1089
        %v1091 = vsub.f32 1.0, %v1090
        %v1092 = vmul.f32 %v1089, %v1091
        %v1093 = vadd.f32 %v1089, %v1092
        %vm1094 = vweird.f32 %v1088
        %vm1095 = vweird.f32 %v1089
        %vm1096 = vmor %vm1094, %vm1095
        %v1097 = vsel %vm1096, %v1089, %v1093
        %v1098 = vand.u32 2147483647, %v1088
        %vm1099 = vcmp.eq.f32.partialorder %v1098, 8.507059e+37
        %v1100 = vand.u32 %v1088, 2147483648
        %v1101 = vor.u32 1.1754944e-38, %v1100
        %v1102 = vsel %vm1099, %v1101, %v1097
        %v1103 = vmul.f32 %v1075, %v1102
        %v1105 = vperm.slane %v1061, 0
        %v1107 = vadd.f32 %v1103, %v1105
        %v1108 = vld [vmem:[%s6] sm:$0xff]
        %v1109 = vld [vmem:[%s6 + $0x8] sm:$0xff]
        %v1110 = vld [vmem:[%s6 + $0x10] sm:$0xff]
        %v1111 = vld [vmem:[%s6 + $0x18] sm:$0xff]
        %v1112 = vld [vmem:[#allocation11] sm:$0x1]
        %v1114 = vperm.slane %v1112, 0
        %v1117 = vsel %vm591, %v1107, 0
        %1119 = vmatpush.msra.mxu0 0.0
        %1120 = vmatpush.msra.mxu0 0.0
        %1121 = vmatpush.msra.mxu0 0.0
        %1122 = vmatpush.msra.mxu0 0.0
        %1123 = vmatpush.msra.mxu0 0.0
        %1124 = vmatpush.msra.mxu0 0.0
        %1125 = vmatpush.msra.mxu0 0.0
        %1126 = vmatpush.msra.mxu0 0.0
        %1127 = vmatpush.msra.mxu0 0.0
        %1128 = vmatpush.msra.mxu0 0.0
        %1129 = vmatpush.msra.mxu0 0.0
        %1130 = vmatpush.msra.mxu0 0.0
        %1131 = vmatpush.msra.mxu0 %v1111
        %1132 = vmatpush.msra.mxu0 %v1110
        %1133 = vmatpush.msra.mxu0 %v1109
        %1134 = vmatpush.msra.mxu0 %v1108
        %1135 = vmatmul.f32.gmra.mxu0 %v1117
        %v1136 = vpop.f32.mrf.mxu0
        %v1137 = vadd.f32 %v1114, %v1136
        %1138 = vdwg.mxu0
        %v1139 = vmax.f32 %v1137, 0.0
        %v1140 = vld [vmem:[%s8] sm:$0xff]
        %v1141 = vld [vmem:[%s8 + $0x8] sm:$0xff]
        %v1142 = vld [vmem:[%s8 + $0x10] sm:$0xff]
        %v1143 = vld [vmem:[%s8 + $0x18] sm:$0xff]
        %v1144 = vld [vmem:[%s8 + $0x20] sm:$0xff]
        %v1145 = vld [vmem:[%s8 + $0x28] sm:$0xff]
        %v1146 = vld [vmem:[%s8 + $0x30] sm:$0xff]
        %v1147 = vld [vmem:[%s8 + $0x38] sm:$0xff]
        %vm1148 = vcmask 523264
        %v1150 = vsel %vm1148, %v1139, 0
        %1152 = vmatpush.msra.mxu0 0.0
        %1153 = vmatpush.msra.mxu0 0.0
        %1154 = vmatpush.msra.mxu0 0.0
        %1155 = vmatpush.msra.mxu0 0.0
        %1156 = vmatpush.msra.mxu0 0.0
        %1157 = vmatpush.msra.mxu0 0.0
        %1158 = vmatpush.msra.mxu0 0.0
        %1159 = vmatpush.msra.mxu0 0.0
        %1160 = vmatpush.msra.mxu0 %v1147
        %1161 = vmatpush.msra.mxu0 %v1146
        %1162 = vmatpush.msra.mxu0 %v1145
        %1163 = vmatpush.msra.mxu0 %v1144
        %1164 = vmatpush.msra.mxu0 %v1143
        %1165 = vmatpush.msra.mxu0 %v1142
        %1166 = vmatpush.msra.mxu0 %v1141
        %1167 = vmatpush.msra.mxu0 %v1140
        %1168 = vmatmul.f32.gmra.mxu0 %v1150
        %v1169 = vpop.f32.mrf.mxu0
        %v1170 = vadd.f32 0.0, %v1169
        %1171 = vdwg.mxu0
        %v1172 = vadd.f32 %v1057, %v1170
        %v1173 = vld [vmem:[#allocation12] sm:$0x1]
        %v1175 = vperm.slane %v1173, 0
        %v1177 = vadd.f32 %v1172, %v1175
        %s1178 = scalar_lea.vmem %s10, 2
        %v1179 = vld [vmem:[%s1178] sm:$0x1]
        %s1180 = scalar_lea.vmem %s11, 2
        %v1181 = vld [vmem:[%s1180] sm:$0x1]
        %v1182 = vsel %vm591, %v1177, 0.0
        %1183 = vadd.xlane.f32.xlu0 %v1182
        %v1184 = vpop.xlane.xlu0 %1183
        %v1185 = vmul.f32 %v1184, %v601
        %v1186 = vsub.f32 %v1177, %v1185
        %v1187 = vmul.f32 %v1186, %v1186
        %v1188 = vsel %vm591, %v1187, 0.0
        %1189 = vadd.xlane.f32.xlu0 %v1188
        %v1190 = vpop.xlane.xlu0 %1189
        %v1191 = vmul.f32 %v1190, %v614
        %v1193 = vperm.slane %v1179, 0
        %v1195 = vmul.f32 %v1193, %v1186
        %v1196 = vrsqrt.pop %v1191
        %v1197 = vmul.f32 %v1196, %v1191
        %v1198 = vmul.f32 %v1197, %v1196
        %v1199 = vmul.f32 0.5, %v1198
        %v1200 = vsub.f32 1.5, %v1199
        %v1201 = vmul.f32 %v1196, %v1200
        %v1202 = vmul.f32 %v1191, %v1201
        %vm1203 = vcmp.eq.f32.partialorder %v1191, inf
        %v1204 = vsel %vm1203, %v1191, %v1202
        %vm1205 = vcmp.eq.f32.partialorder %v1191, 0.0
        %v1206 = vand.u32 %v1191, 2147483648
        %v1207 = vsel %vm1205, %v1206, %v1204
        %v1208 = vadd.f32 %v1207, 1e-06
        %v1209 = vrcp.pop %v1208
        %v1210 = vmul.f32 %v1208, %v1209
        %v1211 = vsub.f32 1.0, %v1210
        %v1212 = vmul.f32 %v1209, %v1211
        %v1213 = vadd.f32 %v1209, %v1212
        %vm1214 = vweird.f32 %v1208
        %vm1215 = vweird.f32 %v1209
        %vm1216 = vmor %vm1214, %vm1215
        %v1217 = vsel %vm1216, %v1209, %v1213
        %v1218 = vand.u32 2147483647, %v1208
        %vm1219 = vcmp.eq.f32.partialorder %v1218, 8.507059e+37
        %v1220 = vand.u32 %v1208, 2147483648
        %v1221 = vor.u32 1.1754944e-38, %v1220
        %v1222 = vsel %vm1219, %v1221, %v1217
        %v1223 = vmul.f32 %v1195, %v1222
        %v1225 = vperm.slane %v1181, 0
        %v1227 = vadd.f32 %v1223, %v1225
        %s1228 = scalar_lea.vmem %s2, 32
        %v1229 = vld [vmem:[%s1228] sm:$0xff]
        %v1230 = vld [vmem:[%s1228 + $0x8] sm:$0xff]
        %v1231 = vld [vmem:[%s1228 + $0x10] sm:$0xff]
        %v1232 = vld [vmem:[%s1228 + $0x18] sm:$0xff]
        %s1233 = scalar_lea.vmem [#allocation8], 1
        %v1234 = vld [vmem:[%s1233] sm:$0x1]
        %v1236 = vperm.slane %v1234, 0
        %v1239 = vsel %vm591, %v1227, 0
        %1241 = vmatpush.msra.mxu0 0.0
        %1242 = vmatpush.msra.mxu0 0.0
        %1243 = vmatpush.msra.mxu0 0.0
        %1244 = vmatpush.msra.mxu0 0.0
        %1245 = vmatpush.msra.mxu0 0.0
        %1246 = vmatpush.msra.mxu0 0.0
        %1247 = vmatpush.msra.mxu0 0.0
        %1248 = vmatpush.msra.mxu0 0.0
        %1249 = vmatpush.msra.mxu0 0.0
        %1250 = vmatpush.msra.mxu0 0.0
        %1251 = vmatpush.msra.mxu0 0.0
        %1252 = vmatpush.msra.mxu0 0.0
        %1253 = vmatpush.msra.mxu0 %v1232
        %1254 = vmatpush.msra.mxu0 %v1231
        %1255 = vmatpush.msra.mxu0 %v1230
        %1256 = vmatpush.msra.mxu0 %v1229
        %1257 = vmatmul.f32.gmra.mxu0 %v1239
        %v1258 = vpop.f32.mrf.mxu0
        %v1259 = vadd.f32 %v1236, %v1258
        %1260 = vdwg.mxu0
        %1262 = vrot.lane.b32.xlu0 %v1259, 96
        %v1263 = vpop.permute.xlu0 %1262
        %v1264 = vsel %vm686, %v1259, 0
        %v1266 = vsel %vm686, %v1263, 0
        %1268 = vmatpush.xpose.msra.mxu0 0.0
        %1269 = vmatpush.xpose.msra.mxu0 0.0
        %1270 = vmatpush.xpose.msra.mxu0 0.0
        %1271 = vmatpush.xpose.msra.mxu0 0.0
        %1272 = vmatpush.xpose.msra.mxu0 0.0
        %1273 = vmatpush.xpose.msra.mxu0 0.0
        %1274 = vmatpush.xpose.msra.mxu0 0.0
        %1275 = vmatpush.xpose.msra.mxu0 0.0
        %1276 = vmatpush.xpose.msra.mxu0 0.0
        %1277 = vmatpush.xpose.msra.mxu0 0.0
        %1278 = vmatpush.xpose.msra.mxu0 0.0
        %1279 = vmatpush.xpose.msra.mxu0 0.0
        %1280 = vmatpush.xpose.msra.mxu0 0.0
        %1281 = vmatpush.xpose.msra.mxu0 0.0
        %1282 = vmatpush.xpose.msra.mxu0 0.0
        %1283 = vmatpush.xpose.msra.mxu0 %v1266
        %1284 = vmatmul.f32.gmra.mxu0 %v1264
        %v1285 = vpop.f32.mrf.mxu0
        %v1286 = vadd.f32 0.0, %v1285
        %1287 = vdwg.mxu0
        %v1288 = vmul.f32 %v1286, 0.35355338
        %v1289 = vsel %vm714, %v1288, -1e+09
        %v1290 = vsel %vm686, %v1289, -inf
        %1291 = vmax.xlane.f32.xlu0 %v1290
        %v1292 = vpop.xlane.xlu0 %1291
        %v1293 = vsub.f32 %v1289, %v1292
        %v1294 = vmul.f32 %v1293, 1.442695
        %v1295 = vpow.pop %v1294
        %v1296 = vsel %vm686, %v1295, 0.0
        %1297 = vadd.xlane.f32.xlu0 %v1296
        %v1298 = vpop.xlane.xlu0 %1297
        %v1299 = vrcp.pop %v1298
        %v1300 = vmul.f32 %v1298, %v1299
        %v1301 = vsub.f32 1.0, %v1300
        %v1302 = vmul.f32 %v1299, %v1301
        %v1303 = vadd.f32 %v1299, %v1302
        %vm1304 = vweird.f32 %v1298
        %vm1305 = vweird.f32 %v1299
        %vm1306 = vmor %vm1304, %vm1305
        %v1307 = vsel %vm1306, %v1299, %v1303
        %v1308 = vand.u32 2147483647, %v1298
        %vm1309 = vcmp.eq.f32.partialorder %v1308, 8.507059e+37
        %v1310 = vand.u32 %v1298, 2147483648
        %v1311 = vor.u32 1.1754944e-38, %v1310
        %v1312 = vsel %vm1309, %v1311, %v1307
        %v1313 = vmul.f32 %v1295, %v1312
        %1314 = vrot.lane.b32.xlu0 %v1259, 64
        %v1315 = vpop.permute.xlu0 %1314
        %v1318 = vsel %vm686, %v1313, 0
        %1320 = vmatpush.msra.mxu0 0.0
        %1321 = vmatpush.msra.mxu0 0.0
        %1322 = vmatpush.msra.mxu0 0.0
        %1323 = vmatpush.msra.mxu0 0.0
        %1324 = vmatpush.msra.mxu0 0.0
        %1325 = vmatpush.msra.mxu0 0.0
        %1326 = vmatpush.msra.mxu0 0.0
        %1327 = vmatpush.msra.mxu0 0.0
        %1328 = vmatpush.msra.mxu0 0.0
        %1329 = vmatpush.msra.mxu0 0.0
        %1330 = vmatpush.msra.mxu0 0.0
        %1331 = vmatpush.msra.mxu0 0.0
        %1332 = vmatpush.msra.mxu0 0.0
        %1333 = vmatpush.msra.mxu0 0.0
        %1334 = vmatpush.msra.mxu0 0.0
        %1335 = vmatpush.msra.mxu0 %v1315
        %1336 = vmatmul.f32.gmra.mxu0 %v1318
        %v1337 = vpop.f32.mrf.mxu0
        %v1338 = vadd.f32 0.0, %v1337
        %1339 = vdwg.mxu0
        %1340 = vst.msk [vmem:[#allocation2] sm:$0xff] %vm686, %v1338
        %1341 = vrot.lane.b32.xlu0 %v1259, 120
        %v1342 = vpop.permute.xlu0 %1341
        %1343 = vrot.lane.b32.xlu0 %v1259, 88
        %v1344 = vpop.permute.xlu0 %1343
        %v1345 = vsel %vm686, %v1342, 0
        %v1347 = vsel %vm686, %v1344, 0
        %1349 = vmatpush.xpose.msra.mxu0 0.0
        %1350 = vmatpush.xpose.msra.mxu0 0.0
        %1351 = vmatpush.xpose.msra.mxu0 0.0
        %1352 = vmatpush.xpose.msra.mxu0 0.0
        %1353 = vmatpush.xpose.msra.mxu0 0.0
        %1354 = vmatpush.xpose.msra.mxu0 0.0
        %1355 = vmatpush.xpose.msra.mxu0 0.0
        %1356 = vmatpush.xpose.msra.mxu0 0.0
        %1357 = vmatpush.xpose.msra.mxu0 0.0
        %1358 = vmatpush.xpose.msra.mxu0 0.0
        %1359 = vmatpush.xpose.msra.mxu0 0.0
        %1360 = vmatpush.xpose.msra.mxu0 0.0
        %1361 = vmatpush.xpose.msra.mxu0 0.0
        %1362 = vmatpush.xpose.msra.mxu0 0.0
        %1363 = vmatpush.xpose.msra.mxu0 0.0
        %1364 = vmatpush.xpose.msra.mxu0 %v1347
        %1365 = vmatmul.f32.gmra.mxu0 %v1345
        %v1366 = vpop.f32.mrf.mxu0
        %v1367 = vadd.f32 0.0, %v1366
        %1368 = vdwg.mxu0
        %v1369 = vmul.f32 %v1367, 0.35355338
        %v1370 = vsel %vm714, %v1369, -1e+09
        %v1371 = vsel %vm686, %v1370, -inf
        %1372 = vmax.xlane.f32.xlu0 %v1371
        %v1373 = vpop.xlane.xlu0 %1372
        %v1374 = vsub.f32 %v1370, %v1373
        %v1375 = vmul.f32 %v1374, 1.442695
        %v1376 = vpow.pop %v1375
        %v1377 = vsel %vm686, %v1376, 0.0
        %1378 = vadd.xlane.f32.xlu0 %v1377
        %v1379 = vpop.xlane.xlu0 %1378
        %v1380 = vrcp.pop %v1379
        %v1381 = vmul.f32 %v1379, %v1380
        %v1382 = vsub.f32 1.0, %v1381
        %v1383 = vmul.f32 %v1380, %v1382
        %v1384 = vadd.f32 %v1380, %v1383
        %vm1385 = vweird.f32 %v1379
        %vm1386 = vweird.f32 %v1380
        %vm1387 = vmor %vm1385, %vm1386
        %v1388 = vsel %vm1387, %v1380, %v1384
        %v1389 = vand.u32 2147483647, %v1379
        %vm1390 = vcmp.eq.f32.partialorder %v1389, 8.507059e+37
        %v1391 = vand.u32 %v1379, 2147483648
        %v1392 = vor.u32 1.1754944e-38, %v1391
        %v1393 = vsel %vm1390, %v1392, %v1388
        %v1394 = vmul.f32 %v1376, %v1393
        %1395 = vrot.lane.b32.xlu0 %v1259, 56
        %v1396 = vpop.permute.xlu0 %1395
        %v1399 = vsel %vm686, %v1394, 0
        %1401 = vmatpush.msra.mxu0 0.0
        %1402 = vmatpush.msra.mxu0 0.0
        %1403 = vmatpush.msra.mxu0 0.0
        %1404 = vmatpush.msra.mxu0 0.0
        %1405 = vmatpush.msra.mxu0 0.0
        %1406 = vmatpush.msra.mxu0 0.0
        %1407 = vmatpush.msra.mxu0 0.0
        %1408 = vmatpush.msra.mxu0 0.0
        %1409 = vmatpush.msra.mxu0 0.0
        %1410 = vmatpush.msra.mxu0 0.0
        %1411 = vmatpush.msra.mxu0 0.0
        %1412 = vmatpush.msra.mxu0 0.0
        %1413 = vmatpush.msra.mxu0 0.0
        %1414 = vmatpush.msra.mxu0 0.0
        %1415 = vmatpush.msra.mxu0 0.0
        %1416 = vmatpush.msra.mxu0 %v1396
        %1417 = vmatmul.f32.gmra.mxu0 %v1399
        %v1418 = vpop.f32.mrf.mxu0
        %v1419 = vadd.f32 0.0, %v1418
        %1420 = vdwg.mxu0
        %1422 = vrot.lane.b32.xlu0 %v1419, 8
        %v1423 = vpop.permute.xlu0 %1422
        %1425 = vst.msk [vmem:[#allocation2] sm:$0xff] %vm851, %v1423
        %1426 = vrot.lane.b32.xlu0 %v1259, 112
        %v1427 = vpop.permute.xlu0 %1426
        %1428 = vrot.lane.b32.xlu0 %v1259, 80
        %v1429 = vpop.permute.xlu0 %1428
        %v1430 = vsel %vm686, %v1427, 0
        %v1432 = vsel %vm686, %v1429, 0
        %1434 = vmatpush.xpose.msra.mxu0 0.0
        %1435 = vmatpush.xpose.msra.mxu0 0.0
        %1436 = vmatpush.xpose.msra.mxu0 0.0
        %1437 = vmatpush.xpose.msra.mxu0 0.0
        %1438 = vmatpush.xpose.msra.mxu0 0.0
        %1439 = vmatpush.xpose.msra.mxu0 0.0
        %1440 = vmatpush.xpose.msra.mxu0 0.0
        %1441 = vmatpush.xpose.msra.mxu0 0.0
        %1442 = vmatpush.xpose.msra.mxu0 0.0
        %1443 = vmatpush.xpose.msra.mxu0 0.0
        %1444 = vmatpush.xpose.msra.mxu0 0.0
        %1445 = vmatpush.xpose.msra.mxu0 0.0
        %1446 = vmatpush.xpose.msra.mxu0 0.0
        %1447 = vmatpush.xpose.msra.mxu0 0.0
        %1448 = vmatpush.xpose.msra.mxu0 0.0
        %1449 = vmatpush.xpose.msra.mxu0 %v1432
        %1450 = vmatmul.f32.gmra.mxu0 %v1430
        %v1451 = vpop.f32.mrf.mxu0
        %v1452 = vadd.f32 0.0, %v1451
        %1453 = vdwg.mxu0
        %v1454 = vmul.f32 %v1452, 0.35355338
        %v1455 = vsel %vm714, %v1454, -1e+09
        %v1456 = vsel %vm686, %v1455, -inf
        %1457 = vmax.xlane.f32.xlu0 %v1456
        %v1458 = vpop.xlane.xlu0 %1457
        %v1459 = vsub.f32 %v1455, %v1458
        %v1460 = vmul.f32 %v1459, 1.442695
        %v1461 = vpow.pop %v1460
        %v1462 = vsel %vm686, %v1461, 0.0
        %1463 = vadd.xlane.f32.xlu0 %v1462
        %v1464 = vpop.xlane.xlu0 %1463
        %v1465 = vrcp.pop %v1464
        %v1466 = vmul.f32 %v1464, %v1465
        %v1467 = vsub.f32 1.0, %v1466
        %v1468 = vmul.f32 %v1465, %v1467
        %v1469 = vadd.f32 %v1465, %v1468
        %vm1470 = vweird.f32 %v1464
        %vm1471 = vweird.f32 %v1465
        %vm1472 = vmor %vm1470, %vm1471
        %v1473 = vsel %vm1472, %v1465, %v1469
        %v1474 = vand.u32 2147483647, %v1464
        %vm1475 = vcmp.eq.f32.partialorder %v1474, 8.507059e+37
        %v1476 = vand.u32 %v1464, 2147483648
        %v1477 = vor.u32 1.1754944e-38, %v1476
        %v1478 = vsel %vm1475, %v1477, %v1473
        %v1479 = vmul.f32 %v1461, %v1478
        %1480 = vrot.lane.b32.xlu0 %v1259, 48
        %v1481 = vpop.permute.xlu0 %1480
        %v1484 = vsel %vm686, %v1479, 0
        %1486 = vmatpush.msra.mxu0 0.0
        %1487 = vmatpush.msra.mxu0 0.0
        %1488 = vmatpush.msra.mxu0 0.0
        %1489 = vmatpush.msra.mxu0 0.0
        %1490 = vmatpush.msra.mxu0 0.0
        %1491 = vmatpush.msra.mxu0 0.0
        %1492 = vmatpush.msra.mxu0 0.0
        %1493 = vmatpush.msra.mxu0 0.0
        %1494 = vmatpush.msra.mxu0 0.0
        %1495 = vmatpush.msra.mxu0 0.0
        %1496 = vmatpush.msra.mxu0 0.0
        %1497 = vmatpush.msra.mxu0 0.0
        %1498 = vmatpush.msra.mxu0 0.0
        %1499 = vmatpush.msra.mxu0 0.0
        %1500 = vmatpush.msra.mxu0 0.0
        %1501 = vmatpush.msra.mxu0 %v1481
        %1502 = vmatmul.f32.gmra.mxu0 %v1484
        %v1503 = vpop.f32.mrf.mxu0
        %v1504 = vadd.f32 0.0, %v1503
        %1505 = vdwg.mxu0
        %1507 = vrot.lane.b32.xlu0 %v1504, 16
        %v1508 = vpop.permute.xlu0 %1507
        %1510 = vst.msk [vmem:[#allocation2] sm:$0xff] %vm937, %v1508
        %1511 = vrot.lane.b32.xlu0 %v1259, 104
        %v1512 = vpop.permute.xlu0 %1511
        %1513 = vrot.lane.b32.xlu0 %v1259, 72
        %v1514 = vpop.permute.xlu0 %1513
        %v1515 = vsel %vm686, %v1512, 0
        %v1517 = vsel %vm686, %v1514, 0
        %1519 = vmatpush.xpose.msra.mxu0 0.0
        %1520 = vmatpush.xpose.msra.mxu0 0.0
        %1521 = vmatpush.xpose.msra.mxu0 0.0
        %1522 = vmatpush.xpose.msra.mxu0 0.0
        %1523 = vmatpush.xpose.msra.mxu0 0.0
        %1524 = vmatpush.xpose.msra.mxu0 0.0
        %1525 = vmatpush.xpose.msra.mxu0 0.0
        %1526 = vmatpush.xpose.msra.mxu0 0.0
        %1527 = vmatpush.xpose.msra.mxu0 0.0
        %1528 = vmatpush.xpose.msra.mxu0 0.0
        %1529 = vmatpush.xpose.msra.mxu0 0.0
        %1530 = vmatpush.xpose.msra.mxu0 0.0
        %1531 = vmatpush.xpose.msra.mxu0 0.0
        %1532 = vmatpush.xpose.msra.mxu0 0.0
        %1533 = vmatpush.xpose.msra.mxu0 0.0
        %1534 = vmatpush.xpose.msra.mxu0 %v1517
        %1535 = vmatmul.f32.gmra.mxu0 %v1515
        %v1536 = vpop.f32.mrf.mxu0
        %v1537 = vadd.f32 0.0, %v1536
        %1538 = vdwg.mxu0
        %v1539 = vmul.f32 %v1537, 0.35355338
        %v1540 = vsel %vm714, %v1539, -1e+09
        %v1541 = vsel %vm686, %v1540, -inf
        %1542 = vmax.xlane.f32.xlu0 %v1541
        %v1543 = vpop.xlane.xlu0 %1542
        %v1544 = vsub.f32 %v1540, %v1543
        %v1545 = vmul.f32 %v1544, 1.442695
        %v1546 = vpow.pop %v1545
        %v1547 = vsel %vm686, %v1546, 0.0
        %1548 = vadd.xlane.f32.xlu0 %v1547
        %v1549 = vpop.xlane.xlu0 %1548
        %v1550 = vrcp.pop %v1549
        %v1551 = vmul.f32 %v1549, %v1550
        %v1552 = vsub.f32 1.0, %v1551
        %v1553 = vmul.f32 %v1550, %v1552
        %v1554 = vadd.f32 %v1550, %v1553
        %vm1555 = vweird.f32 %v1549
        %vm1556 = vweird.f32 %v1550
        %vm1557 = vmor %vm1555, %vm1556
        %v1558 = vsel %vm1557, %v1550, %v1554
        %v1559 = vand.u32 2147483647, %v1549
        %vm1560 = vcmp.eq.f32.partialorder %v1559, 8.507059e+37
        %v1561 = vand.u32 %v1549, 2147483648
        %v1562 = vor.u32 1.1754944e-38, %v1561
        %v1563 = vsel %vm1560, %v1562, %v1558
        %v1564 = vmul.f32 %v1546, %v1563
        %1565 = vrot.lane.b32.xlu0 %v1259, 40
        %v1566 = vpop.permute.xlu0 %1565
        %v1569 = vsel %vm686, %v1564, 0
        %1571 = vmatpush.msra.mxu0 0.0
        %1572 = vmatpush.msra.mxu0 0.0
        %1573 = vmatpush.msra.mxu0 0.0
        %1574 = vmatpush.msra.mxu0 0.0
        %1575 = vmatpush.msra.mxu0 0.0
        %1576 = vmatpush.msra.mxu0 0.0
        %1577 = vmatpush.msra.mxu0 0.0
        %1578 = vmatpush.msra.mxu0 0.0
        %1579 = vmatpush.msra.mxu0 0.0
        %1580 = vmatpush.msra.mxu0 0.0
        %1581 = vmatpush.msra.mxu0 0.0
        %1582 = vmatpush.msra.mxu0 0.0
        %1583 = vmatpush.msra.mxu0 0.0
        %1584 = vmatpush.msra.mxu0 0.0
        %1585 = vmatpush.msra.mxu0 0.0
        %1586 = vmatpush.msra.mxu0 %v1566
        %1587 = vmatmul.f32.gmra.mxu0 %v1569
        %v1588 = vpop.f32.mrf.mxu0
        %v1589 = vadd.f32 0.0, %v1588
        %1590 = vdwg.mxu0
        %1592 = vrot.lane.b32.xlu0 %v1589, 24
        %v1593 = vpop.permute.xlu0 %1592
        %1595 = vst.msk [vmem:[#allocation2] sm:$0xff] %vm1023, %v1593
        %v1596 = vld [vmem:[#allocation2] sm:$0xff]
        %s1597 = scalar_lea.vmem %s4, 32
        %v1598 = vld [vmem:[%s1597] sm:$0xff]
        %v1599 = vld [vmem:[%s1597 + $0x8] sm:$0xff]
        %v1600 = vld [vmem:[%s1597 + $0x10] sm:$0xff]
        %v1601 = vld [vmem:[%s1597 + $0x18] sm:$0xff]
        %s1602 = scalar_lea.vmem [#allocation9], 1
        %v1603 = vld [vmem:[%s1602] sm:$0x1]
        %v1605 = vperm.slane %v1603, 0
        %v1608 = vsel %vm591, %v1596, 0
        %1610 = vmatpush.msra.mxu0 0.0
        %1611 = vmatpush.msra.mxu0 0.0
        %1612 = vmatpush.msra.mxu0 0.0
        %1613 = vmatpush.msra.mxu0 0.0
        %1614 = vmatpush.msra.mxu0 0.0
        %1615 = vmatpush.msra.mxu0 0.0
        %1616 = vmatpush.msra.mxu0 0.0
        %1617 = vmatpush.msra.mxu0 0.0
        %1618 = vmatpush.msra.mxu0 0.0
        %1619 = vmatpush.msra.mxu0 0.0
        %1620 = vmatpush.msra.mxu0 0.0
        %1621 = vmatpush.msra.mxu0 0.0
        %1622 = vmatpush.msra.mxu0 %v1601
        %1623 = vmatpush.msra.mxu0 %v1600
        %1624 = vmatpush.msra.mxu0 %v1599
        %1625 = vmatpush.msra.mxu0 %v1598
        %1626 = vmatmul.f32.gmra.mxu0 %v1608
        %v1627 = vpop.f32.mrf.mxu0
        %v1628 = vadd.f32 %v1605, %v1627
        %1629 = vdwg.mxu0
        %v1630 = vadd.f32 %v1177, %v1628
        %s1631 = scalar_lea.vmem %s10, 3
        %v1632 = vld [vmem:[%s1631] sm:$0x1]
        %s1633 = scalar_lea.vmem %s11, 3
        %v1634 = vld [vmem:[%s1633] sm:$0x1]
        %v1635 = vsel %vm591, %v1630, 0.0
        %1636 = vadd.xlane.f32.xlu0 %v1635
        %v1637 = vpop.xlane.xlu0 %1636
        %v1638 = vmul.f32 %v1637, %v601
        %v1639 = vsub.f32 %v1630, %v1638
        %v1640 = vmul.f32 %v1639, %v1639
        %v1641 = vsel %vm591, %v1640, 0.0
        %1642 = vadd.xlane.f32.xlu0 %v1641
        %v1643 = vpop.xlane.xlu0 %1642
        %v1644 = vmul.f32 %v1643, %v614
        %v1646 = vperm.slane %v1632, 0
        %v1648 = vmul.f32 %v1646, %v1639
        %v1649 = vrsqrt.pop %v1644
        %v1650 = vmul.f32 %v1649, %v1644
        %v1651 = vmul.f32 %v1650, %v1649
        %v1652 = vmul.f32 0.5, %v1651
        %v1653 = vsub.f32 1.5, %v1652
        %v1654 = vmul.f32 %v1649, %v1653
        %v1655 = vmul.f32 %v1644, %v1654
        %vm1656 = vcmp.eq.f32.partialorder %v1644, inf
        %v1657 = vsel %vm1656, %v1644, %v1655
        %vm1658 = vcmp.eq.f32.partialorder %v1644, 0.0
        %v1659 = vand.u32 %v1644, 2147483648
        %v1660 = vsel %vm1658, %v1659, %v1657
        %v1661 = vadd.f32 %v1660, 1e-06
        %v1662 = vrcp.pop %v1661
        %v1663 = vmul.f32 %v1661, %v1662
        %v1664 = vsub.f32 1.0, %v1663
        %v1665 = vmul.f32 %v1662, %v1664
        %v1666 = vadd.f32 %v1662, %v1665
        %vm1667 = vweird.f32 %v1661
        %vm1668 = vweird.f32 %v1662
        %vm1669 = vmor %vm1667, %vm1668
        %v1670 = vsel %vm1669, %v1662, %v1666
        %v1671 = vand.u32 2147483647, %v1661
        %vm1672 = vcmp.eq.f32.partialorder %v1671, 8.507059e+37
        %v1673 = vand.u32 %v1661, 2147483648
        %v1674 = vor.u32 1.1754944e-38, %v1673
        %v1675 = vsel %vm1672, %v1674, %v1670
        %v1676 = vmul.f32 %v1648, %v1675
        %v1678 = vperm.slane %v1634, 0
        %v1680 = vadd.f32 %v1676, %v1678
        %s1681 = scalar_lea.vmem %s6, 32
        %v1682 = vld [vmem:[%s1681] sm:$0xff]
        %v1683 = vld [vmem:[%s1681 + $0x8] sm:$0xff]
        %v1684 = vld [vmem:[%s1681 + $0x10] sm:$0xff]
        %v1685 = vld [vmem:[%s1681 + $0x18] sm:$0xff]
        %s1686 = scalar_lea.vmem [#allocation11], 1
        %v1687 = vld [vmem:[%s1686] sm:$0x1]
        %v1689 = vperm.slane %v1687, 0
        %v1692 = vsel %vm591, %v1680, 0
        %1694 = vmatpush.msra.mxu0 0.0
        %1695 = vmatpush.msra.mxu0 0.0
        %1696 = vmatpush.msra.mxu0 0.0
        %1697 = vmatpush.msra.mxu0 0.0
        %1698 = vmatpush.msra.mxu0 0.0
        %1699 = vmatpush.msra.mxu0 0.0
        %1700 = vmatpush.msra.mxu0 0.0
        %1701 = vmatpush.msra.mxu0 0.0
        %1702 = vmatpush.msra.mxu0 0.0
        %1703 = vmatpush.msra.mxu0 0.0
        %1704 = vmatpush.msra.mxu0 0.0
        %1705 = vmatpush.msra.mxu0 0.0
        %1706 = vmatpush.msra.mxu0 %v1685
        %1707 = vmatpush.msra.mxu0 %v1684
        %1708 = vmatpush.msra.mxu0 %v1683
        %1709 = vmatpush.msra.mxu0 %v1682
        %1710 = vmatmul.f32.gmra.mxu0 %v1692
        %v1711 = vpop.f32.mrf.mxu0
        %v1712 = vadd.f32 %v1689, %v1711
        %1713 = vdwg.mxu0
        %v1714 = vmax.f32 %v1712, 0.0
        %s1715 = scalar_lea.vmem %s8, 64
        %v1716 = vld [vmem:[%s1715] sm:$0xff]
        %v1717 = vld [vmem:[%s1715 + $0x8] sm:$0xff]
        %v1718 = vld [vmem:[%s1715 + $0x10] sm:$0xff]
        %v1719 = vld [vmem:[%s1715 + $0x18] sm:$0xff]
        %v1720 = vld [vmem:[%s1715 + $0x20] sm:$0xff]
        %v1721 = vld [vmem:[%s1715 + $0x28] sm:$0xff]
        %v1722 = vld [vmem:[%s1715 + $0x30] sm:$0xff]
        %v1723 = vld [vmem:[%s1715 + $0x38] sm:$0xff]
        %v1725 = vsel %vm1148, %v1714, 0
        %1727 = vmatpush.msra.mxu0 0.0
        %1728 = vmatpush.msra.mxu0 0.0
        %1729 = vmatpush.msra.mxu0 0.0
        %1730 = vmatpush.msra.mxu0 0.0
        %1731 = vmatpush.msra.mxu0 0.0
        %1732 = vmatpush.msra.mxu0 0.0
        %1733 = vmatpush.msra.mxu0 0.0
        %1734 = vmatpush.msra.mxu0 0.0
        %1735 = vmatpush.msra.mxu0 %v1723
        %1736 = vmatpush.msra.mxu0 %v1722
        %1737 = vmatpush.msra.mxu0 %v1721
        %1738 = vmatpush.msra.mxu0 %v1720
        %1739 = vmatpush.msra.mxu0 %v1719
        %1740 = vmatpush.msra.mxu0 %v1718
        %1741 = vmatpush.msra.mxu0 %v1717
        %1742 = vmatpush.msra.mxu0 %v1716
        %1743 = vmatmul.f32.gmra.mxu0 %v1725
        %v1744 = vpop.f32.mrf.mxu0
        %v1745 = vadd.f32 0.0, %v1744
        %1746 = vdwg.mxu0
        %v1747 = vadd.f32 %v1630, %v1745
        %s1748 = scalar_lea.vmem [#allocation12], 1
        %v1749 = vld [vmem:[%s1748] sm:$0x1]
        %v1751 = vperm.slane %v1749, 0
        %v1753 = vadd.f32 %v1747, %v1751
        %v1754 = vld [vmem:[%s12] sm:$0x1]
        %v1755 = vld [vmem:[%s13] sm:$0x1]
        %v1756 = vsel %vm591, %v1753, 0.0
        %1757 = vadd.xlane.f32.xlu0 %v1756
        %v1758 = vpop.xlane.xlu0 %1757
        %v1759 = vmul.f32 %v1758, %v601
        %v1760 = vsub.f32 %v1753, %v1759
        %v1761 = vmul.f32 %v1760, %v1760
        %v1762 = vsel %vm591, %v1761, 0.0
        %1763 = vadd.xlane.f32.xlu0 %v1762
        %v1764 = vpop.xlane.xlu0 %1763
        %v1765 = vmul.f32 %v1764, %v614
        %v1767 = vperm.slane %v1754, 0
        %v1769 = vmul.f32 %v1767, %v1760
        %v1770 = vrsqrt.pop %v1765
        %v1771 = vmul.f32 %v1770, %v1765
        %v1772 = vmul.f32 %v1771, %v1770
        %v1773 = vmul.f32 0.5, %v1772
        %v1774 = vsub.f32 1.5, %v1773
        %v1775 = vmul.f32 %v1770, %v1774
        %v1776 = vmul.f32 %v1765, %v1775
        %vm1777 = vcmp.eq.f32.partialorder %v1765, inf
        %v1778 = vsel %vm1777, %v1765, %v1776
        %vm1779 = vcmp.eq.f32.partialorder %v1765, 0.0
        %v1780 = vand.u32 %v1765, 2147483648
        %v1781 = vsel %vm1779, %v1780, %v1778
        %v1782 = vadd.f32 %v1781, 1e-06
        %v1783 = vrcp.pop %v1782
        %v1784 = vmul.f32 %v1782, %v1783
        %v1785 = vsub.f32 1.0, %v1784
        %v1786 = vmul.f32 %v1783, %v1785
        %v1787 = vadd.f32 %v1783, %v1786
        %vm1788 = vweird.f32 %v1782
        %vm1789 = vweird.f32 %v1783
        %vm1790 = vmor %vm1788, %vm1789
        %v1791 = vsel %vm1790, %v1783, %v1787
        %v1792 = vand.u32 2147483647, %v1782
        %vm1793 = vcmp.eq.f32.partialorder %v1792, 8.507059e+37
        %v1794 = vand.u32 %v1782, 2147483648
        %v1795 = vor.u32 1.1754944e-38, %v1794
        %v1796 = vsel %vm1793, %v1795, %v1791
        %v1797 = vmul.f32 %v1769, %v1796
        %v1799 = vperm.slane %v1755, 0
        %v1801 = vadd.f32 %v1797, %v1799
        %1802 = vst.msk [vmem:[%s585] sm:$0xff] %vm591, %v1801
        %s1803 = sand.u32 %s348, 1
        %s1804 = scalar_lea.sflag [#allocation5], %s1803
        %s1805 = sand.u32 %s348, 1
        %s1806 = smul.addr %s1805, 8
        %s1807 = scalar_lea.vmem [#allocation14], %s1806
        // Predicated region
        $region101: #{encoder_forward.1} parent=75 // pred_check
          %p1808 = pneg %p358
        $region102: #{encoder_forward.1} parent=75 // pred_check_branch
          %1810 = sbr.rel (%p1808) target = $region104
        $region103: #{encoder_forward.1} parent=75 // pred_region
          %1812 = vsyncadd %s1804, 0
          %s1813 = smul.addr %s36, 8
          %s1814 = scalar_lea.hbm %s14, %s1813
          %s1816 = sshll.u32 %s1807, 4
          %s1817 = int_to_ptr.vmem [resolvable:$true] %s1816
          %s1818 = sshll.u32 %s1814, 4
          %s1819 = int_to_ptr.hbm [resolvable:$true] %s1818
          %1821 = dma.vmem_to_hbm [thread:$0]  %s1817, 128, %s1819, %s1804
        $region104: #{encoder_forward.1} parent=75 // pred_fallthru
          _
      $region76: #{encoder_forward.1} parent=5 // pred_fallthru
        _
      %p1822 = scmp.le.s32.totalorder 2, %s31
      // Predicated region
      $region105: #{encoder_forward.1} parent=5 // pred_check
        %p1823 = pneg %p1822
      $region106: #{encoder_forward.1} parent=5 // pred_check_branch
        %1825 = sbr.rel (%p1823) target = $region108
      $region107: #{encoder_forward.1} parent=5 // pred_region
        %s1826 = ssub.s32 %s31, 2
        // Predicated region
        $region109: #{encoder_forward.1} parent=107 // pred_check
          %p1827 = pneg %p364
        $region110: #{encoder_forward.1} parent=107 // pred_check_branch
          %1829 = sbr.rel (%p1827) target = $region112
        $region111: #{encoder_forward.1} parent=107 // pred_region
          %s1830 = sand.u32 %s349, 1
          %s1831 = scalar_lea.sflag [#allocation5], %s1830
          %s1832 = sand.u32 %s349, 1
          %s1833 = smul.addr %s1832, 8
          %s1834 = scalar_lea.vmem [#allocation14], %s1833
          %1836 = dma.done %s1831, 128
        $region112: #{encoder_forward.1} parent=107 // pred_fallthru
          _
      $region108: #{encoder_forward.1} parent=5 // pred_fallthru
        _
    $region6: #{encoder_forward.1} parent=1 // loop_footer
      %s35 = sadd.s32 1, %s31
    $region7: #{encoder_forward.1} parent=1 // loop_footer_branch
      %30 = sbr.rel target = $region3
    $region8: #{encoder_forward.1} parent=1 // loop_exit
      _
    %1837 = vsyncpa [#allocation4], 1
    %s1838 = scalar_lea.sflag [#allocation4], 1
    %1839 = vsyncpa %s1838, 1
    %1840 = vsyncpa [#allocation7], 1
    %s1841 = scalar_lea.sflag [#allocation7], 1
    %1842 = vsyncpa %s1841, 1
    %1843 = vsyncpa [#allocation10], 1
    %1844 = vsyncpa [#allocation13], 1
    %1845 = vsyncpa [#allocation5], 1
    %s1846 = scalar_lea.sflag [#allocation5], 1
    %1847 = vsyncpa %s1846, 1

</llo_original>
